<compile_context>
chip_gen: v6e
topology: v6e:2x2x1
jax: 0.10.0
libtpu: 0.0.40
codegen_flags: <defaults>
</compile_context>

<pallas_src>
import jax
import jax.numpy as jnp
import numpy as np
from jax import lax
from jax.experimental import pallas as pl
from jax.experimental.pallas import tpu as pltpu


# ----------------------------------------------------------------------------
# Fused Pallas kernel (whole TCN forward for one batch block)
# ----------------------------------------------------------------------------
def _make_fused_tcn_kernel(layer_meta, n_layers, is_even, has_up, up_b_row,
                           Co, Bt, T, N, T_final):
    """layer_meta[l] = (K, Ci, weight_row0, n_weight_cols, vec_row0); all static."""

    def kernel(x_ref, blob_ref, o_ref):
        x = x_ref[...]                                        # (Bt, T, N, Cin)

        def tcn_layer(cur, meta):
            """One TCNLayer as a single im2col matmul (w1 || w2 [|| up_w] fused)."""
            K, Ci, wrow, ncols, vrow = meta
            To = cur.shape[1] - K + 1
            # im2col along the contraction dim -> one matmul per layer.
            cols = jnp.concatenate([cur[:, dt:dt + To] for dt in range(K)], axis=-1)
            m = cols.reshape(Bt * To * N, K * Ci)
            w = blob_ref[wrow:wrow + K * Ci, :ncols]
            acc = jnp.dot(m, w, preferred_element_type=jnp.float32)
            b1 = blob_ref[vrow:vrow + 1, :Co]
            b2 = blob_ref[vrow + 1:vrow + 2, :Co]
            scale = blob_ref[vrow + 2:vrow + 3, :Co]
            shift = blob_ref[vrow + 3:vrow + 4, :Co]
            a1 = acc[:, :Co] + b1
            a2 = acc[:, Co:2 * Co] + b2
            gated = jnp.maximum(a1, 0.0) * jax.nn.sigmoid(a2)   # relu * sigmoid gate
            bn = gated * scale + shift                          # eval-mode BatchNorm2d
            # TODO(synk): dropout is identity here (eval mode); train-mode RNG dropout omitted.
            return bn.reshape(Bt, To, N, Co), acc, To

        # ---- layer 0 (the 1x1 upsample residual rides along as extra columns) ----
        out, acc0, To0 = tcn_layer(x, layer_meta[0])
        if has_up:
            up_b = blob_ref[up_b_row:up_b_row + 1, :Co]
            res2 = (acc0[:, 2 * Co:3 * Co] + up_b).reshape(Bt, To0, N, Co)  # = ResConn[:, 2:]
        else:
            res2 = x[:, 2:]                       # identity residual (Cin == Co)
        out = out + res2

        # ---- middle layers (kernel 3 -> time shift of 2 per layer) ----
        for i in range(1, n_layers):
            oi, _, _ = tcn_layer(out, layer_meta[i])
            out = oi + out[:, 2:] + res2[:, 2 * i:]
        # ---- even n_history: final kernel-2 layer + last-step residuals ----
        if is_even:
            oe, _, _ = tcn_layer(out, layer_meta[-1])
            out = oe + out[:, -1:] + res2[:, -1:]

        # Lane-dense store: (Bt, T_final, N*Co) -> unmasked full-lane vst.
        o_ref[...] = out.reshape(Bt, T_final, N * Co).astype(o_ref.dtype)

    return kernel


# ----------------------------------------------------------------------------
# One-time parameter prep (outside the kernel, independent of x)
# ----------------------------------------------------------------------------
def prepare_params(params):
    """Fold BN to scale/shift, fuse w1||w2 (and up_w into layer 0), and pack
    EVERYTHING into one lane-padded 2-D blob -> the kernel has 2 operands."""
    eps = 1e-5
    layers = params["layers"]
    n_layers = params["n_layers"]
    is_even = params["is_even"]
    n_total = len(layers)
    Co = int(layers[0]["w1"].shape[-1])
    Cin = int(layers[0]["w1"].shape[1])
    has_up = params["up_w"] is not None

    # The module uses kernel=3 for all regular layers and kernel=2 for the
    # optional final (even n_history) layer; the residual time shifts in the
    # kernel (out[:, 2:], res2[:, 2*i:]) rely on this, so check it statically.
    for i, lp in enumerate(layers):
        k = int(lp["w1"].shape[0])
        assert k == (2 if (is_even and i == n_total - 1) else 3), (i, k)

    ncols0 = (3 if has_up else 2) * Co
    lanew = 128 * ((max(ncols0, 2 * Co) + 127) // 128)

    def pad_cols(a):
        return jnp.pad(a.astype(jnp.float32), ((0, 0), (0, lanew - a.shape[1])))

    blocks, w_infos, vec_rows = [], [], []
    row = 0
    for i, lp in enumerate(layers):
        K, Ci = int(lp["w1"].shape[0]), int(lp["w1"].shape[1])
        wcat = jnp.concatenate([lp["w1"].reshape(K * Ci, Co),
                                lp["w2"].reshape(K * Ci, Co)], axis=-1)
        ncols = 2 * Co
        if i == 0 and has_up:
            # 1x1 upsample residual -> extra output columns, active only on the
            # last tap (dt = K-1), so acc[:, 2Co:3Co] == (x[:, 2:] @ up_w).
            res_cols = jnp.zeros((K * Ci, Co), jnp.float32)
            res_cols = res_cols.at[(K - 1) * Ci:].set(params["up_w"])
            wcat = jnp.concatenate([wcat, res_cols], axis=-1)
            ncols = 3 * Co
        blocks.append(pad_cols(wcat))
        w_infos.append((K, Ci, row, ncols))
        row += K * Ci

    for lp in layers:
        scale = lp["gamma"] * lax.rsqrt(lp["var"] + eps)
        shift = lp["beta"] - lp["mean"] * scale
        blocks.append(pad_cols(jnp.stack([lp["b1"], lp["b2"], scale, shift], axis=0)))
        vec_rows.append(row)
        row += 4

    up_b_row = None
    if has_up:
        blocks.append(pad_cols(params["up_b"].reshape(1, Co)))
        up_b_row = row
        row += 1

    pad = (-row) % 8                      # keep the blob sublane-aligned
    if pad:
        blocks.append(jnp.zeros((pad, lanew), jnp.float32))
    blob = jnp.concatenate(blocks, axis=0)

    layer_meta = tuple((*w_infos[i], vec_rows[i]) for i in range(n_total))
    return dict(n_layers=n_layers, is_even=is_even, has_up=has_up,
                cin=Cin, cout=Co, blob=blob,
                layer_meta=layer_meta, up_b_row=up_b_row)


# ----------------------------------------------------------------------------
# Wrapper: single pallas_call for the whole forward
# ----------------------------------------------------------------------------
def tcn_forward(x, pp, num_batch_blocks=None):
    """TCN.forward: x (B, n_history, N, in_features) -> (B, T_final, N, mid)."""
    B, T, N, Cin = x.shape
    n_layers, is_even, Co = pp["n_layers"], pp["is_even"], pp["cout"]
    T_final = T - 2 * n_layers - (1 if is_even else 0)

    # v7x: 2 parallel grid steps (one per TensorCore), with B/2 batch elements
    # folded into the matmul M dim per step.  On single-TC v5e/v6e pass
    # num_batch_blocks=1 to fold everything into one step (saves ~0.35us).
    if num_batch_blocks is None:
        num_batch_blocks = 2 if (B >= 2 and B % 2 == 0) else 1
    G = num_batch_blocks
    assert B % G == 0
    Bt = B // G

    blob = pp["blob"]
    R, LANEW = blob.shape
    kernel = _make_fused_tcn_kernel(pp["layer_meta"], n_layers, is_even,
                                    pp["has_up"], pp["up_b_row"],
                                    Co, Bt, T, N, T_final)

    # NOTE: before scaling to large node counts, add an N-tile grid axis and
    # set pltpu.CompilerParams(vmem_limit_bytes=...) — at toy sizes the whole
    # working set (a few hundred KB) fits trivially in VMEM.
    out_flat = pl.pallas_call(
        kernel,
        out_shape=jax.ShapeDtypeStruct((B, T_final, N * Co), jnp.float32),
        grid_spec=pltpu.PrefetchScalarGridSpec(
            num_scalar_prefetch=0,
            grid=(G,),
            in_specs=[
                pl.BlockSpec((Bt, T, N, Cin), lambda g: (g, 0, 0, 0)),
                pl.BlockSpec((R, LANEW), lambda g: (0, 0)),    # one packed-weight DMA
            ],
            out_specs=pl.BlockSpec((Bt, T_final, N * Co), lambda g: (g, 0, 0)),
        ),
        compiler_params=pltpu.CompilerParams(
            dimension_semantics=("parallel",)),
    )(x, blob)
    return out_flat.reshape(B, T_final, N, Co)


# ----------------------------------------------------------------------------
# Deterministic parameter initialization (matching the module's shapes)
# ----------------------------------------------------------------------------
def init_params(key, n_history, in_features, mid_features):
    assert n_history >= 3
    is_even = (n_history % 2 == 0)
    n_layers = n_history // 2 if not is_even else n_history // 2 - 1

    cfg = [(in_features, mid_features, 3)]
    for _ in range(n_layers - 1):
        cfg.append((mid_features, mid_features, 3))
    if is_even:
        cfg.append((mid_features, mid_features, 2))

    layers = []
    for (cin, cout, k) in cfg:
        key, *ks = jax.random.split(key, 9)
        layers.append(dict(
            w1=0.2 * jax.random.normal(ks[0], (k, cin, cout), jnp.float32),
            b1=0.1 * jax.random.normal(ks[1], (cout,), jnp.float32),
            w2=0.2 * jax.random.normal(ks[2], (k, cin, cout), jnp.float32),
            b2=0.1 * jax.random.normal(ks[3], (cout,), jnp.float32),
            gamma=1.0 + 0.1 * jax.random.normal(ks[4], (cout,), jnp.float32),
            beta=0.1 * jax.random.normal(ks[5], (cout,), jnp.float32),
            mean=0.1 * jax.random.normal(ks[6], (cout,), jnp.float32),
            var=jnp.abs(jax.random.normal(ks[7], (cout,), jnp.float32)) + 0.5,
        ))

    params = dict(layers=layers, n_layers=n_layers, is_even=is_even)
    if in_features != mid_features:
        key, k1, k2 = jax.random.split(key, 3)
        params["up_w"] = 0.2 * jax.random.normal(k1, (in_features, mid_features), jnp.float32)
        params["up_b"] = 0.1 * jax.random.normal(k2, (mid_features,), jnp.float32)
    else:
        params["up_w"] = None
        params["up_b"] = None
    return params


# ----------------------------------------------------------------------------
# Pure-JAX reference (mirrors the PyTorch forward, eval mode)
# ----------------------------------------------------------------------------
def _tcn_layer_ref(x, lp):
    K = lp["w1"].shape[0]
    T_out = x.shape[1] - K + 1
    Cout = lp["w1"].shape[-1]
    acc1 = jnp.zeros(x.shape[:1] + (T_out, x.shape[2], Cout), jnp.float32)
    acc2 = jnp.zeros_like(acc1)
    for dt in range(K):
        xs = x[:, dt:dt + T_out]
        acc1 = acc1 + jnp.einsum("btnc,cd->btnd", xs, lp["w1"][dt])
        acc2 = acc2 + jnp.einsum("btnc,cd->btnd", xs, lp["w2"][dt])
    acc1 = acc1 + lp["b1"]
    acc2 = acc2 + lp["b2"]
    gated = jax.nn.relu(acc1) * jax.nn.sigmoid(acc2)
    eps = 1e-5
    scale = lp["gamma"] / jnp.sqrt(lp["var"] + eps)
    shift = lp["beta"] - lp["mean"] * scale
    return gated * scale + shift


def tcn_forward_ref(x, params):
    if params["up_w"] is not None:
        res_conn = jnp.einsum("btnc,cd->btnd", x, params["up_w"]) + params["up_b"]
    else:
        res_conn = x
    out = _tcn_layer_ref(x, params["layers"][0]) + res_conn[:, 2:]
    for i in range(1, params["n_layers"]):
        out = _tcn_layer_ref(out, params["layers"][i]) + out[:, 2:] + res_conn[:, 2 * (i + 1):]
    if params["is_even"]:
        out = _tcn_layer_ref(out, params["layers"][-1]) + out[:, -1:, :, :] + res_conn[:, -1:]
    return out


# ----------------------------------------------------------------------------
if __name__ == "__main__":
    B, T, N, C_IN, C_MID = 2, 8, 16, 4, 32   # n_history=8 (even) -> 3+1 layers
    key = jax.random.PRNGKey(0)
    kx, kp = jax.random.split(key)
    x = jax.random.normal(kx, (B, T, N, C_IN), jnp.float32)
    raw_params = init_params(kp, T, C_IN, C_MID)
    prepped = prepare_params(raw_params)     # one-time prep, outside the kernel

    out = tcn_forward(x, prepped)
    out = jax.block_until_ready(out)

    assert out.shape == (B, 1, N, C_MID), out.shape
    ref = tcn_forward_ref(x, raw_params)
    np.testing.assert_allclose(np.asarray(out), np.asarray(ref), rtol=2e-2, atol=2e-2)
    print("KERNEL_OK")
</pallas_src>

<mosaic_0001>
module attributes {stable_mosaic.version = 11 : i64} {
  func.func @kernel(%arg0: i32, %arg1: memref<1x8x16x4xf32, #tpu.memory_space<vmem>>, %arg2: memref<288x128xf32, #tpu.memory_space<vmem>>, %arg3: memref<1x1x512xf32, #tpu.memory_space<vmem>>) attributes {dimension_semantics = [#tpu.dimension_semantics<parallel>], iteration_bounds = array<i64: 2>, scalar_prefetch = 0 : i64, scratch_operands = 0 : i64, tpu.core_type = #tpu.core_type<tc>, window_params = [{transform_indices = @transform_0, window_bounds = array<i64: 1, 8, 16, 4>}, {pipeline_mode = #tpu.pipeline_mode<synchronous>, transform_indices = @transform_1, window_bounds = array<i64: 288, 128>}, {transform_indices = @transform_2, window_bounds = array<i64: 1, 1, 512>}]} {
    %c0 = arith.constant 0 : index
    %c0_0 = arith.constant 0 : index
    %c0_1 = arith.constant 0 : index
    %c0_2 = arith.constant 0 : index
    %0 = vector.load %arg1[%c0, %c0_0, %c0_1, %c0_2] : memref<1x8x16x4xf32, #tpu.memory_space<vmem>>, vector<1x8x16x4xf32>
    %1 = vector.extract_strided_slice %0 {offsets = [0, 0, 0, 0], sizes = [1, 6, 16, 4], strides = [1, 1, 1, 1]} : vector<1x8x16x4xf32> to vector<1x6x16x4xf32>
    %2 = vector.extract_strided_slice %0 {offsets = [0, 1, 0, 0], sizes = [1, 6, 16, 4], strides = [1, 1, 1, 1]} : vector<1x8x16x4xf32> to vector<1x6x16x4xf32>
    %3 = vector.extract_strided_slice %0 {offsets = [0, 2, 0, 0], sizes = [1, 6, 16, 4], strides = [1, 1, 1, 1]} : vector<1x8x16x4xf32> to vector<1x6x16x4xf32>
    %4 = tpu.concatenate %1, %2, %3 in 3 : vector<1x6x16x4xf32>, vector<1x6x16x4xf32>, vector<1x6x16x4xf32> -> vector<1x6x16x12xf32>
    %5 = vector.shape_cast %4 : vector<1x6x16x12xf32> to vector<96x12xf32>
    %c0_3 = arith.constant 0 : index
    %c0_4 = arith.constant 0 : index
    %6 = vector.load %arg2[%c0_3, %c0_4] : memref<288x128xf32, #tpu.memory_space<vmem>>, vector<12x96xf32>
    %cst = arith.constant dense<0.000000e+00> : vector<96x96xf32>
    %7 = tpu.matmul %5, %6, %cst {dimension_numbers = #tpu.dot_dimension_numbers<[1], [0], [0], [1], [0, 0, 1, 1], [], []>} : vector<96x12xf32>, vector<12x96xf32>, vector<96x96xf32> -> vector<96x96xf32>
    %c268 = arith.constant 268 : index
    %c0_5 = arith.constant 0 : index
    %8 = vector.load %arg2[%c268, %c0_5] : memref<288x128xf32, #tpu.memory_space<vmem>>, vector<1x32xf32>
    %c269 = arith.constant 269 : index
    %c0_6 = arith.constant 0 : index
    %9 = vector.load %arg2[%c269, %c0_6] : memref<288x128xf32, #tpu.memory_space<vmem>>, vector<1x32xf32>
    %c270 = arith.constant 270 : index
    %c0_7 = arith.constant 0 : index
    %10 = vector.load %arg2[%c270, %c0_7] : memref<288x128xf32, #tpu.memory_space<vmem>>, vector<1x32xf32>
    %c271 = arith.constant 271 : index
    %c0_8 = arith.constant 0 : index
    %11 = vector.load %arg2[%c271, %c0_8] : memref<288x128xf32, #tpu.memory_space<vmem>>, vector<1x32xf32>
    %12 = vector.extract_strided_slice %7 {offsets = [0, 0], sizes = [96, 32], strides = [1, 1]} : vector<96x96xf32> to vector<96x32xf32>
    %13 = vector.broadcast %8 : vector<1x32xf32> to vector<96x32xf32>
    %14 = arith.addf %12, %13 : vector<96x32xf32>
    %15 = vector.extract_strided_slice %7 {offsets = [0, 32], sizes = [96, 32], strides = [1, 1]} : vector<96x96xf32> to vector<96x32xf32>
    %16 = vector.broadcast %9 : vector<1x32xf32> to vector<96x32xf32>
    %17 = arith.addf %15, %16 : vector<96x32xf32>
    %cst_9 = arith.constant 0.000000e+00 : f32
    %18 = vector.broadcast %cst_9 : f32 to vector<96x32xf32>
    %19 = arith.maximumf %14, %18 : vector<96x32xf32>
    %20 = arith.negf %17 : vector<96x32xf32>
    %21 = math.exp %20 : vector<96x32xf32>
    %cst_10 = arith.constant 1.000000e+00 : f32
    %22 = vector.broadcast %cst_10 : f32 to vector<96x32xf32>
    %23 = arith.addf %22, %21 : vector<96x32xf32>
    %24 = arith.divf %22, %23 : vector<96x32xf32>
    %25 = arith.mulf %19, %24 : vector<96x32xf32>
    %26 = vector.broadcast %10 : vector<1x32xf32> to vector<96x32xf32>
    %27 = arith.mulf %25, %26 : vector<96x32xf32>
    %28 = vector.broadcast %11 : vector<1x32xf32> to vector<96x32xf32>
    %29 = arith.addf %27, %28 : vector<96x32xf32>
    %30 = vector.shape_cast %29 : vector<96x32xf32> to vector<1x6x16x32xf32>
    %c284 = arith.constant 284 : index
    %c0_11 = arith.constant 0 : index
    %31 = vector.load %arg2[%c284, %c0_11] : memref<288x128xf32, #tpu.memory_space<vmem>>, vector<1x32xf32>
    %32 = vector.extract_strided_slice %7 {offsets = [0, 64], sizes = [96, 32], strides = [1, 1]} : vector<96x96xf32> to vector<96x32xf32>
    %33 = vector.broadcast %31 : vector<1x32xf32> to vector<96x32xf32>
    %34 = arith.addf %32, %33 : vector<96x32xf32>
    %35 = vector.shape_cast %34 : vector<96x32xf32> to vector<1x6x16x32xf32>
    %36 = arith.addf %30, %35 : vector<1x6x16x32xf32>
    %37 = vector.extract_strided_slice %36 {offsets = [0, 0, 0, 0], sizes = [1, 4, 16, 32], strides = [1, 1, 1, 1]} : vector<1x6x16x32xf32> to vector<1x4x16x32xf32>
    %38 = vector.extract_strided_slice %36 {offsets = [0, 1, 0, 0], sizes = [1, 4, 16, 32], strides = [1, 1, 1, 1]} : vector<1x6x16x32xf32> to vector<1x4x16x32xf32>
    %39 = vector.extract_strided_slice %36 {offsets = [0, 2, 0, 0], sizes = [1, 4, 16, 32], strides = [1, 1, 1, 1]} : vector<1x6x16x32xf32> to vector<1x4x16x32xf32>
    %40 = tpu.concatenate %37, %38, %39 in 3 : vector<1x4x16x32xf32>, vector<1x4x16x32xf32>, vector<1x4x16x32xf32> -> vector<1x4x16x96xf32>
    %41 = vector.shape_cast %40 : vector<1x4x16x96xf32> to vector<64x96xf32>
    %c12 = arith.constant 12 : index
    %c0_12 = arith.constant 0 : index
    %42 = vector.load %arg2[%c12, %c0_12] : memref<288x128xf32, #tpu.memory_space<vmem>>, vector<96x64xf32>
    %cst_13 = arith.constant dense<0.000000e+00> : vector<64x64xf32>
    %43 = tpu.matmul %41, %42, %cst_13 {dimension_numbers = #tpu.dot_dimension_numbers<[1], [0], [0], [1], [0, 0, 1, 1], [], []>} : vector<64x96xf32>, vector<96x64xf32>, vector<64x64xf32> -> vector<64x64xf32>
    %c272 = arith.constant 272 : index
    %c0_14 = arith.constant 0 : index
    %44 = vector.load %arg2[%c272, %c0_14] : memref<288x128xf32, #tpu.memory_space<vmem>>, vector<1x32xf32>
    %c273 = arith.constant 273 : index
    %c0_15 = arith.constant 0 : index
    %45 = vector.load %arg2[%c273, %c0_15] : memref<288x128xf32, #tpu.memory_space<vmem>>, vector<1x32xf32>
    %c274 = arith.constant 274 : index
    %c0_16 = arith.constant 0 : index
    %46 = vector.load %arg2[%c274, %c0_16] : memref<288x128xf32, #tpu.memory_space<vmem>>, vector<1x32xf32>
    %c275 = arith.constant 275 : index
    %c0_17 = arith.constant 0 : index
    %47 = vector.load %arg2[%c275, %c0_17] : memref<288x128xf32, #tpu.memory_space<vmem>>, vector<1x32xf32>
    %48 = vector.extract_strided_slice %43 {offsets = [0, 0], sizes = [64, 32], strides = [1, 1]} : vector<64x64xf32> to vector<64x32xf32>
    %49 = vector.broadcast %44 : vector<1x32xf32> to vector<64x32xf32>
    %50 = arith.addf %48, %49 : vector<64x32xf32>
    %51 = vector.extract_strided_slice %43 {offsets = [0, 32], sizes = [64, 32], strides = [1, 1]} : vector<64x64xf32> to vector<64x32xf32>
    %52 = vector.broadcast %45 : vector<1x32xf32> to vector<64x32xf32>
    %53 = arith.addf %51, %52 : vector<64x32xf32>
    %cst_18 = arith.constant 0.000000e+00 : f32
    %54 = vector.broadcast %cst_18 : f32 to vector<64x32xf32>
    %55 = arith.maximumf %50, %54 : vector<64x32xf32>
    %56 = arith.negf %53 : vector<64x32xf32>
    %57 = math.exp %56 : vector<64x32xf32>
    %cst_19 = arith.constant 1.000000e+00 : f32
    %58 = vector.broadcast %cst_19 : f32 to vector<64x32xf32>
    %59 = arith.addf %58, %57 : vector<64x32xf32>
    %60 = arith.divf %58, %59 : vector<64x32xf32>
    %61 = arith.mulf %55, %60 : vector<64x32xf32>
    %62 = vector.broadcast %46 : vector<1x32xf32> to vector<64x32xf32>
    %63 = arith.mulf %61, %62 : vector<64x32xf32>
    %64 = vector.broadcast %47 : vector<1x32xf32> to vector<64x32xf32>
    %65 = arith.addf %63, %64 : vector<64x32xf32>
    %66 = vector.shape_cast %65 : vector<64x32xf32> to vector<1x4x16x32xf32>
    %67 = vector.extract_strided_slice %36 {offsets = [0, 2, 0, 0], sizes = [1, 4, 16, 32], strides = [1, 1, 1, 1]} : vector<1x6x16x32xf32> to vector<1x4x16x32xf32>
    %68 = arith.addf %66, %67 : vector<1x4x16x32xf32>
    %69 = vector.extract_strided_slice %35 {offsets = [0, 2, 0, 0], sizes = [1, 4, 16, 32], strides = [1, 1, 1, 1]} : vector<1x6x16x32xf32> to vector<1x4x16x32xf32>
    %70 = arith.addf %68, %69 : vector<1x4x16x32xf32>
    %71 = vector.extract_strided_slice %70 {offsets = [0, 0, 0, 0], sizes = [1, 2, 16, 32], strides = [1, 1, 1, 1]} : vector<1x4x16x32xf32> to vector<1x2x16x32xf32>
    %72 = vector.extract_strided_slice %70 {offsets = [0, 1, 0, 0], sizes = [1, 2, 16, 32], strides = [1, 1, 1, 1]} : vector<1x4x16x32xf32> to vector<1x2x16x32xf32>
    %73 = vector.extract_strided_slice %70 {offsets = [0, 2, 0, 0], sizes = [1, 2, 16, 32], strides = [1, 1, 1, 1]} : vector<1x4x16x32xf32> to vector<1x2x16x32xf32>
    %74 = tpu.concatenate %71, %72, %73 in 3 : vector<1x2x16x32xf32>, vector<1x2x16x32xf32>, vector<1x2x16x32xf32> -> vector<1x2x16x96xf32>
    %75 = vector.shape_cast %74 : vector<1x2x16x96xf32> to vector<32x96xf32>
    %c108 = arith.constant 108 : index
    %c0_20 = arith.constant 0 : index
    %76 = vector.load %arg2[%c108, %c0_20] : memref<288x128xf32, #tpu.memory_space<vmem>>, vector<96x64xf32>
    %cst_21 = arith.constant dense<0.000000e+00> : vector<32x64xf32>
    %77 = tpu.matmul %75, %76, %cst_21 {dimension_numbers = #tpu.dot_dimension_numbers<[1], [0], [0], [1], [0, 0, 1, 1], [], []>} : vector<32x96xf32>, vector<96x64xf32>, vector<32x64xf32> -> vector<32x64xf32>
    %c276 = arith.constant 276 : index
    %c0_22 = arith.constant 0 : index
    %78 = vector.load %arg2[%c276, %c0_22] : memref<288x128xf32, #tpu.memory_space<vmem>>, vector<1x32xf32>
    %c277 = arith.constant 277 : index
    %c0_23 = arith.constant 0 : index
    %79 = vector.load %arg2[%c277, %c0_23] : memref<288x128xf32, #tpu.memory_space<vmem>>, vector<1x32xf32>
    %c278 = arith.constant 278 : index
    %c0_24 = arith.constant 0 : index
    %80 = vector.load %arg2[%c278, %c0_24] : memref<288x128xf32, #tpu.memory_space<vmem>>, vector<1x32xf32>
    %c279 = arith.constant 279 : index
    %c0_25 = arith.constant 0 : index
    %81 = vector.load %arg2[%c279, %c0_25] : memref<288x128xf32, #tpu.memory_space<vmem>>, vector<1x32xf32>
    %82 = vector.extract_strided_slice %77 {offsets = [0, 0], sizes = [32, 32], strides = [1, 1]} : vector<32x64xf32> to vector<32x32xf32>
    %83 = vector.broadcast %78 : vector<1x32xf32> to vector<32x32xf32>
    %84 = arith.addf %82, %83 : vector<32x32xf32>
    %85 = vector.extract_strided_slice %77 {offsets = [0, 32], sizes = [32, 32], strides = [1, 1]} : vector<32x64xf32> to vector<32x32xf32>
    %86 = vector.broadcast %79 : vector<1x32xf32> to vector<32x32xf32>
    %87 = arith.addf %85, %86 : vector<32x32xf32>
    %cst_26 = arith.constant 0.000000e+00 : f32
    %88 = vector.broadcast %cst_26 : f32 to vector<32x32xf32>
    %89 = arith.maximumf %84, %88 : vector<32x32xf32>
    %90 = arith.negf %87 : vector<32x32xf32>
    %91 = math.exp %90 : vector<32x32xf32>
    %cst_27 = arith.constant 1.000000e+00 : f32
    %92 = vector.broadcast %cst_27 : f32 to vector<32x32xf32>
    %93 = arith.addf %92, %91 : vector<32x32xf32>
    %94 = arith.divf %92, %93 : vector<32x32xf32>
    %95 = arith.mulf %89, %94 : vector<32x32xf32>
    %96 = vector.broadcast %80 : vector<1x32xf32> to vector<32x32xf32>
    %97 = arith.mulf %95, %96 : vector<32x32xf32>
    %98 = vector.broadcast %81 : vector<1x32xf32> to vector<32x32xf32>
    %99 = arith.addf %97, %98 : vector<32x32xf32>
    %100 = vector.shape_cast %99 : vector<32x32xf32> to vector<1x2x16x32xf32>
    %101 = vector.extract_strided_slice %70 {offsets = [0, 2, 0, 0], sizes = [1, 2, 16, 32], strides = [1, 1, 1, 1]} : vector<1x4x16x32xf32> to vector<1x2x16x32xf32>
    %102 = arith.addf %100, %101 : vector<1x2x16x32xf32>
    %103 = vector.extract_strided_slice %35 {offsets = [0, 4, 0, 0], sizes = [1, 2, 16, 32], strides = [1, 1, 1, 1]} : vector<1x6x16x32xf32> to vector<1x2x16x32xf32>
    %104 = arith.addf %102, %103 : vector<1x2x16x32xf32>
    %105 = vector.extract_strided_slice %104 {offsets = [0, 0, 0, 0], sizes = [1, 1, 16, 32], strides = [1, 1, 1, 1]} : vector<1x2x16x32xf32> to vector<1x1x16x32xf32>
    %106 = vector.extract_strided_slice %104 {offsets = [0, 1, 0, 0], sizes = [1, 1, 16, 32], strides = [1, 1, 1, 1]} : vector<1x2x16x32xf32> to vector<1x1x16x32xf32>
    %107 = tpu.concatenate %105, %106 in 3 : vector<1x1x16x32xf32>, vector<1x1x16x32xf32> -> vector<1x1x16x64xf32>
    %108 = vector.shape_cast %107 : vector<1x1x16x64xf32> to vector<16x64xf32>
    %c204 = arith.constant 204 : index
    %c0_28 = arith.constant 0 : index
    %109 = vector.load %arg2[%c204, %c0_28] : memref<288x128xf32, #tpu.memory_space<vmem>>, vector<64x64xf32>
    %cst_29 = arith.constant dense<0.000000e+00> : vector<16x64xf32>
    %110 = tpu.matmul %108, %109, %cst_29 {dimension_numbers = #tpu.dot_dimension_numbers<[1], [0], [0], [1], [0, 0, 1, 1], [], []>} : vector<16x64xf32>, vector<64x64xf32>, vector<16x64xf32> -> vector<16x64xf32>
    %c280 = arith.constant 280 : index
    %c0_30 = arith.constant 0 : index
    %111 = vector.load %arg2[%c280, %c0_30] : memref<288x128xf32, #tpu.memory_space<vmem>>, vector<1x32xf32>
    %c281 = arith.constant 281 : index
    %c0_31 = arith.constant 0 : index
    %112 = vector.load %arg2[%c281, %c0_31] : memref<288x128xf32, #tpu.memory_space<vmem>>, vector<1x32xf32>
    %c282 = arith.constant 282 : index
    %c0_32 = arith.constant 0 : index
    %113 = vector.load %arg2[%c282, %c0_32] : memref<288x128xf32, #tpu.memory_space<vmem>>, vector<1x32xf32>
    %c283 = arith.constant 283 : index
    %c0_33 = arith.constant 0 : index
    %114 = vector.load %arg2[%c283, %c0_33] : memref<288x128xf32, #tpu.memory_space<vmem>>, vector<1x32xf32>
    %115 = vector.extract_strided_slice %110 {offsets = [0, 0], sizes = [16, 32], strides = [1, 1]} : vector<16x64xf32> to vector<16x32xf32>
    %116 = vector.broadcast %111 : vector<1x32xf32> to vector<16x32xf32>
    %117 = arith.addf %115, %116 : vector<16x32xf32>
    %118 = vector.extract_strided_slice %110 {offsets = [0, 32], sizes = [16, 32], strides = [1, 1]} : vector<16x64xf32> to vector<16x32xf32>
    %119 = vector.broadcast %112 : vector<1x32xf32> to vector<16x32xf32>
    %120 = arith.addf %118, %119 : vector<16x32xf32>
    %cst_34 = arith.constant 0.000000e+00 : f32
    %121 = vector.broadcast %cst_34 : f32 to vector<16x32xf32>
    %122 = arith.maximumf %117, %121 : vector<16x32xf32>
    %123 = arith.negf %120 : vector<16x32xf32>
    %124 = math.exp %123 : vector<16x32xf32>
    %cst_35 = arith.constant 1.000000e+00 : f32
    %125 = vector.broadcast %cst_35 : f32 to vector<16x32xf32>
    %126 = arith.addf %125, %124 : vector<16x32xf32>
    %127 = arith.divf %125, %126 : vector<16x32xf32>
    %128 = arith.mulf %122, %127 : vector<16x32xf32>
    %129 = vector.broadcast %113 : vector<1x32xf32> to vector<16x32xf32>
    %130 = arith.mulf %128, %129 : vector<16x32xf32>
    %131 = vector.broadcast %114 : vector<1x32xf32> to vector<16x32xf32>
    %132 = arith.addf %130, %131 : vector<16x32xf32>
    %133 = vector.shape_cast %132 : vector<16x32xf32> to vector<1x1x16x32xf32>
    %134 = vector.extract_strided_slice %104 {offsets = [0, 1, 0, 0], sizes = [1, 1, 16, 32], strides = [1, 1, 1, 1]} : vector<1x2x16x32xf32> to vector<1x1x16x32xf32>
    %135 = arith.addf %133, %134 : vector<1x1x16x32xf32>
    %136 = vector.extract_strided_slice %35 {offsets = [0, 5, 0, 0], sizes = [1, 1, 16, 32], strides = [1, 1, 1, 1]} : vector<1x6x16x32xf32> to vector<1x1x16x32xf32>
    %137 = arith.addf %135, %136 : vector<1x1x16x32xf32>
    %138 = vector.shape_cast %137 : vector<1x1x16x32xf32> to vector<1x1x512xf32>
    %c0_36 = arith.constant 0 : index
    %c0_37 = arith.constant 0 : index
    %c0_38 = arith.constant 0 : index
    %139 = vector.load %arg3[%c0_36, %c0_37, %c0_38] : memref<1x1x512xf32, #tpu.memory_space<vmem>>, vector<1x1x512xf32>
    tpu.vector_store %arg3[%c0_36, %c0_37, %c0_38], %138 {strides = array<i32>} : memref<1x1x512xf32, #tpu.memory_space<vmem>>, vector<1x1x512xf32>,
    return
  }
  func.func @transform_0(%arg0: i32) -> (i32, i32, i32, i32) {
    %c0_i32 = arith.constant 0 : i32
    %c0_i32_0 = arith.constant 0 : i32
    %c0_i32_1 = arith.constant 0 : i32
    %c0_i32_2 = arith.constant 0 : i32
    return %arg0, %c0_i32, %c0_i32_0, %c0_i32_1 : i32, i32, i32, i32
  }
  func.func @transform_1(%arg0: i32) -> (i32, i32) {
    %c0_i32 = arith.constant 0 : i32
    %c0_i32_0 = arith.constant 0 : i32
    %c0_i32_1 = arith.constant 0 : i32
    return %c0_i32, %c0_i32_0 : i32, i32
  }
  func.func @transform_2(%arg0: i32) -> (i32, i32, i32) {
    %c0_i32 = arith.constant 0 : i32
    %c0_i32_0 = arith.constant 0 : i32
    %c0_i32_1 = arith.constant 0 : i32
    return %arg0, %c0_i32, %c0_i32_0 : i32, i32, i32
  }
}

</mosaic_0001>

<llo_original>
// kernel: tpu_custom_call.1
$region0: #{tpu_custom_call.1}
  #allocation0 [shape = 'u32[]', space=smem, size = 0x4, offset = 0x4, fixed_abs, tag = 'smem constant byte address 0x4 - core index']
  #allocation1 [shape = 'u32[144,128]{1,0:T(1,128)}', space=vmem, size = 0x12000, scoped, tag = 'internal scratch']
  %s0 = inlined_call_operand.vmem [shape: f32[2,8,16,4], index: 0, kind: input, shape index: {}]
  %s1 = inlined_call_operand.vmem [shape: f32[288,128], index: 1, kind: input, shape index: {}]
  %s2 = inlined_call_operand.hbm [shape: f32[2,1,512], index: 2, kind: output, shape index: {}]
  %s3 = sld [smem:[#allocation0]]
  $region41: #{tpu_custom_call.1} parent=0
    _
  %s5 = ssub.s32 1, %s3
  %s6 = scalar_select 0, %s5, %s3
  $region1: #{tpu_custom_call.1} parent=0
    #allocation2 [shape = 'u8[4096]{0}', space=vmem, size = 0x1000, scoped, tag = 'output window, operand 0']
    #allocation3 [shape = 's32[2]{0}', space=sflag, size = 0x8, scoped, tag = 'scoped memory for tpu_custom_call.1']
    %7 = vsyncpa [#allocation3], 0
    %s8 = scalar_lea.sflag [#allocation3], 1
    %9 = vsyncpa %s8, 0
    loop: start=0, step=1, limit=4
    $region2: #{tpu_custom_call.1} parent=1 // loop_pre_header
      _
    $region3: #{tpu_custom_call.1} parent=1 // loop_header
      %s11 = sphi 0, %s15
      %p12 = scmp.ge.s32.totalorder %s11, 4
      %s21 = sphi 0, %s23
      %s24 = sphi 0, %s21
      %s25 = sphi 0, %s24
      %s41 = sphi 0, %s25
      %s45 = sphi 0, %s45
      %s47 = sphi 0, %s45
      %s48 = sphi 0, %s47
      %s62 = sphi 0, %s48
      %s68 = sphi 0, %s70
      %s71 = sphi 0, %s68
      %s72 = sphi 0, %s71
      %s88 = sphi 0, %s72
    $region4: #{tpu_custom_call.1} parent=1 // loop_header_branch
      %14 = sbr.rel (%p12) target = $region8
    $region5: #{tpu_custom_call.1} parent=1 // loop_body
      %s16 = ssub.s32 %s11, 1
      %s17 = ssub.s32 %s11, 2
      %s18 = sadd.s32 %s11, 1
      %s19 = ssub.s32 %s11, %s18
      %p20 = scmp.eq.s32.totalorder %s19, 0
      %s22 = sadd.s32 %s21, 1
      %s23 = scalar_select %p20, %s21, %s22
      %p26 = pneg %p20
      %p27 = scmp.eq.s32.totalorder %s11, 1
      %p28 = por %p26, %p27
      %p29 = scmp.ne.s32.totalorder %s21, %s24
      %p30 = scmp.eq.s32.totalorder %s11, 0
      %p31 = por %p29, %p30
      %p32 = scmp.ne.s32.totalorder %s21, %s24
      %p33 = scmp.eq.s32.totalorder %s16, 1
      %p34 = por %p32, %p33
      %p35 = scmp.ne.s32.totalorder %s24, %s25
      %p36 = scmp.eq.s32.totalorder %s16, 0
      %p37 = por %p35, %p36
      %p38 = scmp.ne.s32.totalorder %s24, %s25
      %p39 = scmp.eq.s32.totalorder %s17, 1
      %p40 = por %p38, %p39
      %p42 = scmp.ne.s32.totalorder %s25, %s41
      %p43 = scmp.eq.s32.totalorder %s17, 0
      %p44 = por %p42, %p43
      %s46 = sadd.s32 %s45, 1
      %p49 = scmp.eq.s32.totalorder %s11, 1
      %p50 = scmp.ne.s32.totalorder %s45, %s47
      %p51 = scmp.eq.s32.totalorder %s11, 0
      %p52 = por %p50, %p51
      %p53 = scmp.ne.s32.totalorder %s45, %s47
      %p54 = scmp.eq.s32.totalorder %s16, 1
      %p55 = por %p53, %p54
      %p56 = scmp.ne.s32.totalorder %s47, %s48
      %p57 = scmp.eq.s32.totalorder %s16, 0
      %p58 = por %p56, %p57
      %p59 = scmp.ne.s32.totalorder %s47, %s48
      %p60 = scmp.eq.s32.totalorder %s17, 1
      %p61 = por %p59, %p60
      %p63 = scmp.ne.s32.totalorder %s48, %s62
      %p64 = scmp.eq.s32.totalorder %s17, 0
      %p65 = por %p63, %p64
      %s66 = ssub.s32 %s11, %s18
      %p67 = scmp.eq.s32.totalorder %s66, 0
      %s69 = sadd.s32 %s68, 1
      %s70 = scalar_select %p67, %s68, %s69
      %p73 = pneg %p67
      %p74 = scmp.eq.s32.totalorder %s11, 1
      %p75 = por %p73, %p74
      %p76 = scmp.ne.s32.totalorder %s68, %s71
      %p77 = scmp.eq.s32.totalorder %s11, 0
      %p78 = por %p76, %p77
      %p79 = scmp.ne.s32.totalorder %s68, %s71
      %p80 = scmp.eq.s32.totalorder %s16, 1
      %p81 = por %p79, %p80
      %p82 = scmp.ne.s32.totalorder %s71, %s72
      %p83 = scmp.eq.s32.totalorder %s16, 0
      %p84 = por %p82, %p83
      %p85 = scmp.ne.s32.totalorder %s71, %s72
      %p86 = scmp.eq.s32.totalorder %s17, 1
      %p87 = por %p85, %p86
      %p89 = scmp.ne.s32.totalorder %s72, %s88
      %p90 = scmp.eq.s32.totalorder %s17, 0
      %p91 = por %p89, %p90
      %p92 = scmp.le.s32.totalorder 1, %s11
      %p93 = scmp.lt.s32.totalorder %s11, 3
      %p94 = pnand %p92, %p93
      %p95 = pneg %p94
      // Predicated region
      $region9: #{tpu_custom_call.1} parent=5 // pred_check
        _
      $region10: #{tpu_custom_call.1} parent=5 // pred_check_branch
        %97 = sbr.rel (%p94) target = $region12
      $region11: #{tpu_custom_call.1} parent=5 // pred_region
        %s98 = ssub.s32 %s11, 1
        // Predicated region
        $region13: #{tpu_custom_call.1} parent=11 // pred_check
          %p99 = pneg %p58
        $region14: #{tpu_custom_call.1} parent=11 // pred_check_branch
          %101 = sbr.rel (%p99) target = $region16
        $region15: #{tpu_custom_call.1} parent=11 // pred_region
          _
        $region16: #{tpu_custom_call.1} parent=11 // pred_fallthru
          _
      $region12: #{tpu_custom_call.1} parent=5 // pred_fallthru
        _
      %p102 = scmp.lt.s32.totalorder %s11, 2
      // Predicated region
      $region17: #{tpu_custom_call.1} parent=5 // pred_check
        %p103 = pneg %p102
      $region18: #{tpu_custom_call.1} parent=5 // pred_check_branch
        %105 = sbr.rel (%p103) target = $region20
      $region19: #{tpu_custom_call.1} parent=5 // pred_region
        // Predicated region
        $region21: #{tpu_custom_call.1} parent=19 // pred_check
          %p106 = pneg %p31
        $region22: #{tpu_custom_call.1} parent=19 // pred_check_branch
          %108 = sbr.rel (%p106) target = $region24
        $region23: #{tpu_custom_call.1} parent=19 // pred_region
          %p109 = scmp.lt.s32.totalorder %s11, 1
          %s110 = scalar_select %p109, %s11, 1
          %s111 = smul.addr %s110, 16
          %s112 = smul.addr %s111, 8
          %s113 = scalar_lea.vmem %s0, %s112
        $region24: #{tpu_custom_call.1} parent=19 // pred_fallthru
          _
      $region20: #{tpu_custom_call.1} parent=5 // pred_fallthru
        _
      %p114 = scmp.le.s32.totalorder 1, %s11
      %p115 = scmp.lt.s32.totalorder %s11, 3
      %p116 = pnand %p114, %p115
      %p117 = pneg %p116
      // Predicated region
      $region25: #{tpu_custom_call.1} parent=5 // pred_check
        _
      $region26: #{tpu_custom_call.1} parent=5 // pred_check_branch
        %119 = sbr.rel (%p116) target = $region28
      $region27: #{tpu_custom_call.1} parent=5 // pred_region
        %s120 = ssub.s32 %s11, 1
        %p121 = scmp.lt.s32.totalorder %s16, 1
        %s122 = scalar_select %p121, %s16, 1
        %s123 = smul.addr %s122, 16
        %s124 = smul.addr %s123, 8
        %s125 = scalar_lea.vmem %s0, %s124
        %p126 = pneg %p37
        %p127 = pneg %p34
        %p128 = pneg %p58
        %p129 = pneg %p55
        %p130 = pneg %p84
        %p131 = pneg %p81
        %s132 = sand.u32 %s71, 1
        %s133 = scalar_lea.sflag [#allocation3], %s132
        %s134 = sand.u32 %s71, 1
        %s135 = smul.addr %s134, 4
        %s136 = scalar_lea.vmem [#allocation2], %s135
        %p137 = scmp.lt.s32.totalorder %s16, 1
        %s138 = scalar_select %p137, %s16, 1
        %s139 = smul.addr %s138, 16
        %s140 = smul.addr %s139, 8
        %s141 = scalar_lea.vmem %s0, %s140
        %v142 = vld [vmem:[%s141] sm:$0xff]
        %v143 = vld [vmem:[%s141 + $0x8] sm:$0xff]
        %v144 = vld [vmem:[%s141 + $0x10] sm:$0xff]
        %v145 = vld [vmem:[%s141 + $0x18] sm:$0xff]
        %v146 = vld [vmem:[%s141 + $0x20] sm:$0xff]
        %v147 = vld [vmem:[%s141 + $0x28] sm:$0xff]
        %v148 = vld [vmem:[%s141 + $0x30] sm:$0xff]
        %v149 = vld [vmem:[%s141 + $0x38] sm:$0xff]
        %v150 = vld [vmem:[%s141 + $0x40] sm:$0xff]
        %v151 = vld [vmem:[%s141 + $0x48] sm:$0xff]
        %v152 = vld [vmem:[%s141 + $0x50] sm:$0xff]
        %v153 = vld [vmem:[%s141 + $0x58] sm:$0xff]
        %v154 = vld [vmem:[%s141 + $0x60] sm:$0xff]
        %v155 = vld [vmem:[%s141 + $0x68] sm:$0xff]
        %v156 = vld [vmem:[%s141 + $0x70] sm:$0xff]
        %v157 = vld [vmem:[%s141 + $0x78] sm:$0xff]
        %170 = vrot.lane.b32.xlu0 %v144, 4
        %v171 = vpop.permute.xlu0 %170
        %172 = vrot.lane.b32.xlu0 %v145, 4
        %v173 = vpop.permute.xlu0 %172
        %174 = vrot.lane.b32.xlu0 %v146, 4
        %v175 = vpop.permute.xlu0 %174
        %176 = vrot.lane.b32.xlu0 %v147, 4
        %v177 = vpop.permute.xlu0 %176
        %178 = vrot.lane.b32.xlu0 %v148, 4
        %v179 = vpop.permute.xlu0 %178
        %180 = vrot.lane.b32.xlu0 %v149, 4
        %v181 = vpop.permute.xlu0 %180
        %182 = vrot.lane.b32.xlu0 %v150, 4
        %v183 = vpop.permute.xlu0 %182
        %184 = vrot.lane.b32.xlu0 %v151, 4
        %v185 = vpop.permute.xlu0 %184
        %186 = vrot.lane.b32.xlu0 %v152, 4
        %v187 = vpop.permute.xlu0 %186
        %188 = vrot.lane.b32.xlu0 %v153, 4
        %v189 = vpop.permute.xlu0 %188
        %190 = vrot.lane.b32.xlu0 %v154, 4
        %v191 = vpop.permute.xlu0 %190
        %192 = vrot.lane.b32.xlu0 %v155, 4
        %v193 = vpop.permute.xlu0 %192
        %208 = vrot.lane.b32.xlu0 %v146, 8
        %v209 = vpop.permute.xlu0 %208
        %210 = vrot.lane.b32.xlu0 %v147, 8
        %v211 = vpop.permute.xlu0 %210
        %212 = vrot.lane.b32.xlu0 %v148, 8
        %v213 = vpop.permute.xlu0 %212
        %214 = vrot.lane.b32.xlu0 %v149, 8
        %v215 = vpop.permute.xlu0 %214
        %216 = vrot.lane.b32.xlu0 %v150, 8
        %v217 = vpop.permute.xlu0 %216
        %218 = vrot.lane.b32.xlu0 %v151, 8
        %v219 = vpop.permute.xlu0 %218
        %220 = vrot.lane.b32.xlu0 %v152, 8
        %v221 = vpop.permute.xlu0 %220
        %222 = vrot.lane.b32.xlu0 %v153, 8
        %v223 = vpop.permute.xlu0 %222
        %224 = vrot.lane.b32.xlu0 %v154, 8
        %v225 = vpop.permute.xlu0 %224
        %226 = vrot.lane.b32.xlu0 %v155, 8
        %v227 = vpop.permute.xlu0 %226
        %228 = vrot.lane.b32.xlu0 %v156, 8
        %v229 = vpop.permute.xlu0 %228
        %230 = vrot.lane.b32.xlu0 %v157, 8
        %v231 = vpop.permute.xlu0 %230
        %vm244 = vcmask 31744
        %v245 = vsel %vm244, %v142, %v171
        %v246 = vsel %vm244, %v143, %v173
        %v247 = vsel %vm244, %v144, %v175
        %v248 = vsel %vm244, %v145, %v177
        %v249 = vsel %vm244, %v146, %v179
        %v250 = vsel %vm244, %v147, %v181
        %v251 = vsel %vm244, %v148, %v183
        %v252 = vsel %vm244, %v149, %v185
        %v253 = vsel %vm244, %v150, %v187
        %v254 = vsel %vm244, %v151, %v189
        %v255 = vsel %vm244, %v152, %v191
        %v256 = vsel %vm244, %v153, %v193
        %vm257 = vcmask 64512
        %v258 = vsel %vm257, %v245, %v209
        %v259 = vsel %vm257, %v246, %v211
        %v260 = vsel %vm257, %v247, %v213
        %v261 = vsel %vm257, %v248, %v215
        %v262 = vsel %vm257, %v249, %v217
        %v263 = vsel %vm257, %v250, %v219
        %v264 = vsel %vm257, %v251, %v221
        %v265 = vsel %vm257, %v252, %v223
        %v266 = vsel %vm257, %v253, %v225
        %v267 = vsel %vm257, %v254, %v227
        %v268 = vsel %vm257, %v255, %v229
        %v269 = vsel %vm257, %v256, %v231
        %v270 = vld [vmem:[%s1] sm:$0xff]
        %v271 = vld [vmem:[%s1 + $0x8] sm:$0xf]
        %vm272 = vcmask 97280
        %v274 = vsel %vm272, %v258, 0
        %v277 = vsel %vm272, %v259, 0
        %v280 = vsel %vm272, %v260, 0
        %v283 = vsel %vm272, %v261, 0
        %v286 = vsel %vm272, %v262, 0
        %v289 = vsel %vm272, %v263, 0
        %v292 = vsel %vm272, %v264, 0
        %v295 = vsel %vm272, %v265, 0
        %v298 = vsel %vm272, %v266, 0
        %v301 = vsel %vm272, %v267, 0
        %v304 = vsel %vm272, %v268, 0
        %v307 = vsel %vm272, %v269, 0
        %vm309 = vcmask 1043456
        %v311 = vsel %vm309, %v271, 0
        %313 = vmatprep.subr.mxu0 0.0
        %314 = vmatpush1.msra.mxu0 0.0
        %315 = vmatprep.subr.mxu0 0.0
        %316 = vmatpush1.msra.mxu0 0.0
        %317 = vmatprep.subr.mxu0 0.0
        %318 = vmatpush1.msra.mxu0 0.0
        %319 = vmatprep.subr.mxu0 0.0
        %320 = vmatpush1.msra.mxu0 0.0
        %321 = vmatprep.subr.mxu0 0.0
        %322 = vmatpush1.msra.mxu0 0.0
        %323 = vmatprep.subr.mxu0 0.0
        %324 = vmatpush1.msra.mxu0 0.0
        %325 = vmatprep.subr.mxu0 0.0
        %326 = vmatpush1.msra.mxu0 0.0
        %327 = vmatprep.subr.mxu0 0.0
        %328 = vmatpush1.msra.mxu0 0.0
        %329 = vmatprep.subr.mxu0 0.0
        %330 = vmatpush1.msra.mxu0 0.0
        %331 = vmatprep.subr.mxu0 0.0
        %332 = vmatpush1.msra.mxu0 0.0
        %333 = vmatprep.subr.mxu0 0.0
        %334 = vmatpush1.msra.mxu0 0.0
        %335 = vmatprep.subr.mxu0 0.0
        %336 = vmatpush1.msra.mxu0 0.0
        %337 = vmatprep.subr.mxu0 0.0
        %338 = vmatpush1.msra.mxu0 0.0
        %339 = vmatprep.subr.mxu0 0.0
        %340 = vmatpush1.msra.mxu0 0.0
        %341 = vmatprep.subr.mxu0 0.0
        %342 = vmatpush1.msra.mxu0 %v311
        %343 = vmatprep.subr.mxu0 0.0
        %344 = vmatpush1.msra.mxu0 %v270
        %345 = vmatprep.subr.mxu0 0.0
        %346 = vmatpush2.msra.mxu0 0.0
        %347 = vmatprep.subr.mxu0 0.0
        %348 = vmatpush2.msra.mxu0 0.0
        %349 = vmatprep.subr.mxu0 0.0
        %350 = vmatpush2.msra.mxu0 0.0
        %351 = vmatprep.subr.mxu0 0.0
        %352 = vmatpush2.msra.mxu0 0.0
        %353 = vmatprep.subr.mxu0 0.0
        %354 = vmatpush2.msra.mxu0 0.0
        %355 = vmatprep.subr.mxu0 0.0
        %356 = vmatpush2.msra.mxu0 0.0
        %357 = vmatprep.subr.mxu0 0.0
        %358 = vmatpush2.msra.mxu0 0.0
        %359 = vmatprep.subr.mxu0 0.0
        %360 = vmatpush2.msra.mxu0 0.0
        %361 = vmatprep.subr.mxu0 0.0
        %362 = vmatpush2.msra.mxu0 0.0
        %363 = vmatprep.subr.mxu0 0.0
        %364 = vmatpush2.msra.mxu0 0.0
        %365 = vmatprep.subr.mxu0 0.0
        %366 = vmatpush2.msra.mxu0 0.0
        %367 = vmatprep.subr.mxu0 0.0
        %368 = vmatpush2.msra.mxu0 0.0
        %369 = vmatprep.subr.mxu0 0.0
        %370 = vmatpush2.msra.mxu0 0.0
        %371 = vmatprep.subr.mxu0 0.0
        %372 = vmatpush2.msra.mxu0 0.0
        %373 = vmatprep.subr.mxu0 0.0
        %374 = vmatpush2.msra.mxu0 0.0
        %375 = vmatprep.subr.mxu0 0.0
        %376 = vmatpush2.msra.mxu0 0.0
        %377 = vmatprep.mubr.f32.mxu0 0.0
        %378 = vmatmul.mubr.f32.gmra.mxu0 %v274
        %v379 = vpop.f32.mrf.mxu0
        %v380 = vadd.f32 0.0, %v379
        %v381 = vpop.f32.mrf.mxu0
        %382 = vmatprep.mubr.f32.mxu0 0.0
        %383 = vmatmul.mubr.f32.gmra.mxu0 %v277
        %v384 = vpop.f32.mrf.mxu0
        %v385 = vadd.f32 0.0, %v384
        %v386 = vpop.f32.mrf.mxu0
        %387 = vmatprep.mubr.f32.mxu0 0.0
        %388 = vmatmul.mubr.f32.gmra.mxu0 %v280
        %v389 = vpop.f32.mrf.mxu0
        %v390 = vadd.f32 0.0, %v389
        %v391 = vpop.f32.mrf.mxu0
        %392 = vmatprep.mubr.f32.mxu0 0.0
        %393 = vmatmul.mubr.f32.gmra.mxu0 %v283
        %v394 = vpop.f32.mrf.mxu0
        %v395 = vadd.f32 0.0, %v394
        %v396 = vpop.f32.mrf.mxu0
        %397 = vmatprep.mubr.f32.mxu0 0.0
        %398 = vmatmul.mubr.f32.gmra.mxu0 %v286
        %v399 = vpop.f32.mrf.mxu0
        %v400 = vadd.f32 0.0, %v399
        %v401 = vpop.f32.mrf.mxu0
        %402 = vmatprep.mubr.f32.mxu0 0.0
        %403 = vmatmul.mubr.f32.gmra.mxu0 %v289
        %v404 = vpop.f32.mrf.mxu0
        %v405 = vadd.f32 0.0, %v404
        %v406 = vpop.f32.mrf.mxu0
        %407 = vmatprep.mubr.f32.mxu0 0.0
        %408 = vmatmul.mubr.f32.gmra.mxu0 %v292
        %v409 = vpop.f32.mrf.mxu0
        %v410 = vadd.f32 0.0, %v409
        %v411 = vpop.f32.mrf.mxu0
        %412 = vmatprep.mubr.f32.mxu0 0.0
        %413 = vmatmul.mubr.f32.gmra.mxu0 %v295
        %v414 = vpop.f32.mrf.mxu0
        %v415 = vadd.f32 0.0, %v414
        %v416 = vpop.f32.mrf.mxu0
        %417 = vmatprep.mubr.f32.mxu0 0.0
        %418 = vmatmul.mubr.f32.gmra.mxu0 %v298
        %v419 = vpop.f32.mrf.mxu0
        %v420 = vadd.f32 0.0, %v419
        %v421 = vpop.f32.mrf.mxu0
        %422 = vmatprep.mubr.f32.mxu0 0.0
        %423 = vmatmul.mubr.f32.gmra.mxu0 %v301
        %v424 = vpop.f32.mrf.mxu0
        %v425 = vadd.f32 0.0, %v424
        %v426 = vpop.f32.mrf.mxu0
        %427 = vmatprep.mubr.f32.mxu0 0.0
        %428 = vmatmul.mubr.f32.gmra.mxu0 %v304
        %v429 = vpop.f32.mrf.mxu0
        %v430 = vadd.f32 0.0, %v429
        %v431 = vpop.f32.mrf.mxu0
        %432 = vmatprep.mubr.f32.mxu0 0.0
        %433 = vmatmul.mubr.f32.gmra.mxu0 %v307
        %v434 = vpop.f32.mrf.mxu0
        %v435 = vadd.f32 0.0, %v434
        %v436 = vpop.f32.mrf.mxu0
        %437 = vdwg.mxu0
        %v438 = vld [vmem:[%s1 + $0x10c] sm:$0x1]
        %v439 = vld [vmem:[%s1 + $0x10d] sm:$0x1]
        %v440 = vld [vmem:[%s1 + $0x10e] sm:$0x1]
        %v441 = vld [vmem:[%s1 + $0x10f] sm:$0x1]
        %v442 = vlaneseq
        %v443 = vshrl.u32 %v442, 7
        %v444 = vsub.s32 0, %v443
        %v445 = vrot.slane %v438, %v444
        %v446 = vadd.f32 %v380, %v445
        %v447 = vadd.f32 %v385, %v445
        %v448 = vadd.f32 %v390, %v445
        %v449 = vadd.f32 %v395, %v445
        %v450 = vadd.f32 %v400, %v445
        %v451 = vadd.f32 %v405, %v445
        %v452 = vadd.f32 %v410, %v445
        %v453 = vadd.f32 %v415, %v445
        %v454 = vadd.f32 %v420, %v445
        %v455 = vadd.f32 %v425, %v445
        %v456 = vadd.f32 %v430, %v445
        %v457 = vadd.f32 %v435, %v445
        %v458 = vlaneseq
        %v459 = vshrl.u32 %v458, 7
        %v460 = vsub.s32 0, %v459
        %v461 = vrot.slane %v439, %v460
        %463 = vrot.lane.b32.xlu0 %v461, 32
        %v464 = vpop.permute.xlu0 %463
        %v466 = vadd.f32 %v380, %v464
        %v467 = vadd.f32 %v385, %v464
        %v468 = vadd.f32 %v390, %v464
        %v469 = vadd.f32 %v395, %v464
        %v470 = vadd.f32 %v400, %v464
        %v471 = vadd.f32 %v405, %v464
        %v472 = vadd.f32 %v410, %v464
        %v473 = vadd.f32 %v415, %v464
        %v474 = vadd.f32 %v420, %v464
        %v475 = vadd.f32 %v425, %v464
        %v476 = vadd.f32 %v430, %v464
        %v477 = vadd.f32 %v435, %v464
        %v478 = vmax.f32 %v446, 0.0
        %v479 = vmax.f32 %v447, 0.0
        %v480 = vmax.f32 %v448, 0.0
        %v481 = vmax.f32 %v449, 0.0
        %v482 = vmax.f32 %v450, 0.0
        %v483 = vmax.f32 %v451, 0.0
        %v484 = vmax.f32 %v452, 0.0
        %v485 = vmax.f32 %v453, 0.0
        %v486 = vmax.f32 %v454, 0.0
        %v487 = vmax.f32 %v455, 0.0
        %v488 = vmax.f32 %v456, 0.0
        %v489 = vmax.f32 %v457, 0.0
        %v490 = vxor.u32 %v466, 2147483648
        %v491 = vxor.u32 %v467, 2147483648
        %v492 = vxor.u32 %v468, 2147483648
        %v493 = vxor.u32 %v469, 2147483648
        %v494 = vxor.u32 %v470, 2147483648
        %v495 = vxor.u32 %v471, 2147483648
        %v496 = vxor.u32 %v472, 2147483648
        %v497 = vxor.u32 %v473, 2147483648
        %v498 = vxor.u32 %v474, 2147483648
        %v499 = vxor.u32 %v475, 2147483648
        %v500 = vxor.u32 %v476, 2147483648
        %v501 = vxor.u32 %v477, 2147483648
        %v502 = vmul.f32 %v490, 1.442695
        %v503 = vpow.pop %v502
        %v504 = vmul.f32 %v491, 1.442695
        %v505 = vpow.pop %v504
        %v506 = vmul.f32 %v492, 1.442695
        %v507 = vpow.pop %v506
        %v508 = vmul.f32 %v493, 1.442695
        %v509 = vpow.pop %v508
        %v510 = vmul.f32 %v494, 1.442695
        %v511 = vpow.pop %v510
        %v512 = vmul.f32 %v495, 1.442695
        %v513 = vpow.pop %v512
        %v514 = vmul.f32 %v496, 1.442695
        %v515 = vpow.pop %v514
        %v516 = vmul.f32 %v497, 1.442695
        %v517 = vpow.pop %v516
        %v518 = vmul.f32 %v498, 1.442695
        %v519 = vpow.pop %v518
        %v520 = vmul.f32 %v499, 1.442695
        %v521 = vpow.pop %v520
        %v522 = vmul.f32 %v500, 1.442695
        %v523 = vpow.pop %v522
        %v524 = vmul.f32 %v501, 1.442695
        %v525 = vpow.pop %v524
        %v526 = vadd.f32 %v503, 1.0
        %v527 = vadd.f32 %v505, 1.0
        %v528 = vadd.f32 %v507, 1.0
        %v529 = vadd.f32 %v509, 1.0
        %v530 = vadd.f32 %v511, 1.0
        %v531 = vadd.f32 %v513, 1.0
        %v532 = vadd.f32 %v515, 1.0
        %v533 = vadd.f32 %v517, 1.0
        %v534 = vadd.f32 %v519, 1.0
        %v535 = vadd.f32 %v521, 1.0
        %v536 = vadd.f32 %v523, 1.0
        %v537 = vadd.f32 %v525, 1.0
        %v538 = vrcp.pop %v526
        %v539 = vmul.f32 1.0, %v538
        %v540 = vrcp.pop %v527
        %v541 = vmul.f32 1.0, %v540
        %v542 = vrcp.pop %v528
        %v543 = vmul.f32 1.0, %v542
        %v544 = vrcp.pop %v529
        %v545 = vmul.f32 1.0, %v544
        %v546 = vrcp.pop %v530
        %v547 = vmul.f32 1.0, %v546
        %v548 = vrcp.pop %v531
        %v549 = vmul.f32 1.0, %v548
        %v550 = vrcp.pop %v532
        %v551 = vmul.f32 1.0, %v550
        %v552 = vrcp.pop %v533
        %v553 = vmul.f32 1.0, %v552
        %v554 = vrcp.pop %v534
        %v555 = vmul.f32 1.0, %v554
        %v556 = vrcp.pop %v535
        %v557 = vmul.f32 1.0, %v556
        %v558 = vrcp.pop %v536
        %v559 = vmul.f32 1.0, %v558
        %v560 = vrcp.pop %v537
        %v561 = vmul.f32 1.0, %v560
        %574 = vrot.lane.b32.xlu0 %v539, 96
        %v575 = vpop.permute.xlu0 %574
        %576 = vrot.lane.b32.xlu0 %v541, 96
        %v577 = vpop.permute.xlu0 %576
        %578 = vrot.lane.b32.xlu0 %v543, 96
        %v579 = vpop.permute.xlu0 %578
        %580 = vrot.lane.b32.xlu0 %v545, 96
        %v581 = vpop.permute.xlu0 %580
        %582 = vrot.lane.b32.xlu0 %v547, 96
        %v583 = vpop.permute.xlu0 %582
        %584 = vrot.lane.b32.xlu0 %v549, 96
        %v585 = vpop.permute.xlu0 %584
        %586 = vrot.lane.b32.xlu0 %v551, 96
        %v587 = vpop.permute.xlu0 %586
        %588 = vrot.lane.b32.xlu0 %v553, 96
        %v589 = vpop.permute.xlu0 %588
        %590 = vrot.lane.b32.xlu0 %v555, 96
        %v591 = vpop.permute.xlu0 %590
        %592 = vrot.lane.b32.xlu0 %v557, 96
        %v593 = vpop.permute.xlu0 %592
        %594 = vrot.lane.b32.xlu0 %v559, 96
        %v595 = vpop.permute.xlu0 %594
        %596 = vrot.lane.b32.xlu0 %v561, 96
        %v597 = vpop.permute.xlu0 %596
        %v610 = vmul.f32 %v478, %v575
        %v611 = vmul.f32 %v479, %v577
        %v612 = vmul.f32 %v480, %v579
        %v613 = vmul.f32 %v481, %v581
        %v614 = vmul.f32 %v482, %v583
        %v615 = vmul.f32 %v483, %v585
        %v616 = vmul.f32 %v484, %v587
        %v617 = vmul.f32 %v485, %v589
        %v618 = vmul.f32 %v486, %v591
        %v619 = vmul.f32 %v487, %v593
        %v620 = vmul.f32 %v488, %v595
        %v621 = vmul.f32 %v489, %v597
        %v622 = vlaneseq
        %v623 = vshrl.u32 %v622, 7
        %v624 = vsub.s32 0, %v623
        %v625 = vrot.slane %v440, %v624
        %v626 = vmul.f32 %v610, %v625
        %v627 = vmul.f32 %v611, %v625
        %v628 = vmul.f32 %v612, %v625
        %v629 = vmul.f32 %v613, %v625
        %v630 = vmul.f32 %v614, %v625
        %v631 = vmul.f32 %v615, %v625
        %v632 = vmul.f32 %v616, %v625
        %v633 = vmul.f32 %v617, %v625
        %v634 = vmul.f32 %v618, %v625
        %v635 = vmul.f32 %v619, %v625
        %v636 = vmul.f32 %v620, %v625
        %v637 = vmul.f32 %v621, %v625
        %v638 = vlaneseq
        %v639 = vshrl.u32 %v638, 7
        %v640 = vsub.s32 0, %v639
        %v641 = vrot.slane %v441, %v640
        %v642 = vadd.f32 %v626, %v641
        %v643 = vadd.f32 %v627, %v641
        %v644 = vadd.f32 %v628, %v641
        %v645 = vadd.f32 %v629, %v641
        %v646 = vadd.f32 %v630, %v641
        %v647 = vadd.f32 %v631, %v641
        %v648 = vadd.f32 %v632, %v641
        %v649 = vadd.f32 %v633, %v641
        %v650 = vadd.f32 %v634, %v641
        %v651 = vadd.f32 %v635, %v641
        %v652 = vadd.f32 %v636, %v641
        %v653 = vadd.f32 %v637, %v641
        %v654 = vld [vmem:[%s1 + $0x11c] sm:$0x1]
        %v655 = vlaneseq
        %v656 = vshrl.u32 %v655, 7
        %v657 = vsub.s32 0, %v656
        %v658 = vrot.slane %v654, %v657
        %660 = vrot.lane.b32.xlu0 %v658, 64
        %v661 = vpop.permute.xlu0 %660
        %v663 = vadd.f32 %v380, %v661
        %v664 = vadd.f32 %v385, %v661
        %v665 = vadd.f32 %v390, %v661
        %v666 = vadd.f32 %v395, %v661
        %v667 = vadd.f32 %v400, %v661
        %v668 = vadd.f32 %v405, %v661
        %v669 = vadd.f32 %v410, %v661
        %v670 = vadd.f32 %v415, %v661
        %v671 = vadd.f32 %v420, %v661
        %v672 = vadd.f32 %v425, %v661
        %v673 = vadd.f32 %v430, %v661
        %v674 = vadd.f32 %v435, %v661
        %687 = vrot.lane.b32.xlu0 %v663, 64
        %v688 = vpop.permute.xlu0 %687
        %689 = vrot.lane.b32.xlu0 %v664, 64
        %v690 = vpop.permute.xlu0 %689
        %691 = vrot.lane.b32.xlu0 %v665, 64
        %v692 = vpop.permute.xlu0 %691
        %693 = vrot.lane.b32.xlu0 %v666, 64
        %v694 = vpop.permute.xlu0 %693
        %695 = vrot.lane.b32.xlu0 %v667, 64
        %v696 = vpop.permute.xlu0 %695
        %697 = vrot.lane.b32.xlu0 %v668, 64
        %v698 = vpop.permute.xlu0 %697
        %699 = vrot.lane.b32.xlu0 %v669, 64
        %v700 = vpop.permute.xlu0 %699
        %701 = vrot.lane.b32.xlu0 %v670, 64
        %v702 = vpop.permute.xlu0 %701
        %703 = vrot.lane.b32.xlu0 %v671, 64
        %v704 = vpop.permute.xlu0 %703
        %705 = vrot.lane.b32.xlu0 %v672, 64
        %v706 = vpop.permute.xlu0 %705
        %707 = vrot.lane.b32.xlu0 %v673, 64
        %v708 = vpop.permute.xlu0 %707
        %709 = vrot.lane.b32.xlu0 %v674, 64
        %v710 = vpop.permute.xlu0 %709
        %v723 = vadd.f32 %v642, %v688
        %v724 = vadd.f32 %v643, %v690
        %v725 = vadd.f32 %v644, %v692
        %v726 = vadd.f32 %v645, %v694
        %v727 = vadd.f32 %v646, %v696
        %v728 = vadd.f32 %v647, %v698
        %v729 = vadd.f32 %v648, %v700
        %v730 = vadd.f32 %v649, %v702
        %v731 = vadd.f32 %v650, %v704
        %v732 = vadd.f32 %v651, %v706
        %v733 = vadd.f32 %v652, %v708
        %v734 = vadd.f32 %v653, %v710
        %743 = vrot.lane.b32.xlu0 %v725, 32
        %v744 = vpop.permute.xlu0 %743
        %745 = vrot.lane.b32.xlu0 %v726, 32
        %v746 = vpop.permute.xlu0 %745
        %747 = vrot.lane.b32.xlu0 %v727, 32
        %v748 = vpop.permute.xlu0 %747
        %749 = vrot.lane.b32.xlu0 %v728, 32
        %v750 = vpop.permute.xlu0 %749
        %751 = vrot.lane.b32.xlu0 %v729, 32
        %v752 = vpop.permute.xlu0 %751
        %753 = vrot.lane.b32.xlu0 %v730, 32
        %v754 = vpop.permute.xlu0 %753
        %755 = vrot.lane.b32.xlu0 %v731, 32
        %v756 = vpop.permute.xlu0 %755
        %757 = vrot.lane.b32.xlu0 %v732, 32
        %v758 = vpop.permute.xlu0 %757
        %769 = vrot.lane.b32.xlu0 %v727, 64
        %v770 = vpop.permute.xlu0 %769
        %771 = vrot.lane.b32.xlu0 %v728, 64
        %v772 = vpop.permute.xlu0 %771
        %773 = vrot.lane.b32.xlu0 %v729, 64
        %v774 = vpop.permute.xlu0 %773
        %775 = vrot.lane.b32.xlu0 %v730, 64
        %v776 = vpop.permute.xlu0 %775
        %777 = vrot.lane.b32.xlu0 %v731, 64
        %v778 = vpop.permute.xlu0 %777
        %779 = vrot.lane.b32.xlu0 %v732, 64
        %v780 = vpop.permute.xlu0 %779
        %781 = vrot.lane.b32.xlu0 %v733, 64
        %v782 = vpop.permute.xlu0 %781
        %783 = vrot.lane.b32.xlu0 %v734, 64
        %v784 = vpop.permute.xlu0 %783
        %vm793 = vcmask 261120
        %v794 = vsel %vm793, %v723, %v744
        %v795 = vsel %vm793, %v724, %v746
        %v796 = vsel %vm793, %v725, %v748
        %v797 = vsel %vm793, %v726, %v750
        %v798 = vsel %vm793, %v727, %v752
        %v799 = vsel %vm793, %v728, %v754
        %v800 = vsel %vm793, %v729, %v756
        %v801 = vsel %vm793, %v730, %v758
        %vm802 = vcmask 523264
        %v803 = vsel %vm802, %v794, %v770
        %v804 = vsel %vm802, %v795, %v772
        %v805 = vsel %vm802, %v796, %v774
        %v806 = vsel %vm802, %v797, %v776
        %v807 = vsel %vm802, %v798, %v778
        %v808 = vsel %vm802, %v799, %v780
        %v809 = vsel %vm802, %v800, %v782
        %v810 = vsel %vm802, %v801, %v784
        %v811 = vld [vmem:[%s1 + $0xc] sm:$0xff]
        %v812 = vld [vmem:[%s1 + $0x14] sm:$0xff]
        %v813 = vld [vmem:[%s1 + $0x1c] sm:$0xff]
        %v814 = vld [vmem:[%s1 + $0x24] sm:$0xff]
        %v815 = vld [vmem:[%s1 + $0x2c] sm:$0xff]
        %v816 = vld [vmem:[%s1 + $0x34] sm:$0xff]
        %v817 = vld [vmem:[%s1 + $0x3c] sm:$0xff]
        %v818 = vld [vmem:[%s1 + $0x44] sm:$0xff]
        %v819 = vld [vmem:[%s1 + $0x4c] sm:$0xff]
        %v820 = vld [vmem:[%s1 + $0x54] sm:$0xff]
        %v821 = vld [vmem:[%s1 + $0x5c] sm:$0xff]
        %v822 = vld [vmem:[%s1 + $0x64] sm:$0xff]
        %vm823 = vcmask 785408
        %v825 = vsel %vm823, %v803, 0
        %v828 = vsel %vm823, %v804, 0
        %v831 = vsel %vm823, %v805, 0
        %v834 = vsel %vm823, %v806, 0
        %v837 = vsel %vm823, %v807, 0
        %v840 = vsel %vm823, %v808, 0
        %v843 = vsel %vm823, %v809, 0
        %v846 = vsel %vm823, %v810, 0
        %848 = vmatprep.subr.mxu0 0.0
        %849 = vmatpush1.msra.mxu0 0.0
        %850 = vmatprep.subr.mxu0 0.0
        %851 = vmatpush1.msra.mxu0 0.0
        %852 = vmatprep.subr.mxu0 0.0
        %853 = vmatpush1.msra.mxu0 0.0
        %854 = vmatprep.subr.mxu0 0.0
        %855 = vmatpush1.msra.mxu0 0.0
        %856 = vmatprep.subr.mxu0 0.0
        %857 = vmatpush1.msra.mxu0 %v822
        %858 = vmatprep.subr.mxu0 0.0
        %859 = vmatpush1.msra.mxu0 %v821
        %860 = vmatprep.subr.mxu0 0.0
        %861 = vmatpush1.msra.mxu0 %v820
        %862 = vmatprep.subr.mxu0 0.0
        %863 = vmatpush1.msra.mxu0 %v819
        %864 = vmatprep.subr.mxu0 0.0
        %865 = vmatpush1.msra.mxu0 %v818
        %866 = vmatprep.subr.mxu0 0.0
        %867 = vmatpush1.msra.mxu0 %v817
        %868 = vmatprep.subr.mxu0 0.0
        %869 = vmatpush1.msra.mxu0 %v816
        %870 = vmatprep.subr.mxu0 0.0
        %871 = vmatpush1.msra.mxu0 %v815
        %872 = vmatprep.subr.mxu0 0.0
        %873 = vmatpush1.msra.mxu0 %v814
        %874 = vmatprep.subr.mxu0 0.0
        %875 = vmatpush1.msra.mxu0 %v813
        %876 = vmatprep.subr.mxu0 0.0
        %877 = vmatpush1.msra.mxu0 %v812
        %878 = vmatprep.subr.mxu0 0.0
        %879 = vmatpush1.msra.mxu0 %v811
        %880 = vmatprep.subr.mxu0 0.0
        %881 = vmatpush2.msra.mxu0 0.0
        %882 = vmatprep.subr.mxu0 0.0
        %883 = vmatpush2.msra.mxu0 0.0
        %884 = vmatprep.subr.mxu0 0.0
        %885 = vmatpush2.msra.mxu0 0.0
        %886 = vmatprep.subr.mxu0 0.0
        %887 = vmatpush2.msra.mxu0 0.0
        %888 = vmatprep.subr.mxu0 0.0
        %889 = vmatpush2.msra.mxu0 0.0
        %890 = vmatprep.subr.mxu0 0.0
        %891 = vmatpush2.msra.mxu0 0.0
        %892 = vmatprep.subr.mxu0 0.0
        %893 = vmatpush2.msra.mxu0 0.0
        %894 = vmatprep.subr.mxu0 0.0
        %895 = vmatpush2.msra.mxu0 0.0
        %896 = vmatprep.subr.mxu0 0.0
        %897 = vmatpush2.msra.mxu0 0.0
        %898 = vmatprep.subr.mxu0 0.0
        %899 = vmatpush2.msra.mxu0 0.0
        %900 = vmatprep.subr.mxu0 0.0
        %901 = vmatpush2.msra.mxu0 0.0
        %902 = vmatprep.subr.mxu0 0.0
        %903 = vmatpush2.msra.mxu0 0.0
        %904 = vmatprep.subr.mxu0 0.0
        %905 = vmatpush2.msra.mxu0 0.0
        %906 = vmatprep.subr.mxu0 0.0
        %907 = vmatpush2.msra.mxu0 0.0
        %908 = vmatprep.subr.mxu0 0.0
        %909 = vmatpush2.msra.mxu0 0.0
        %910 = vmatprep.subr.mxu0 0.0
        %911 = vmatpush2.msra.mxu0 0.0
        %912 = vmatprep.mubr.f32.mxu0 0.0
        %913 = vmatmul.mubr.f32.gmra.mxu0 %v825
        %v914 = vpop.f32.mrf.mxu0
        %v915 = vadd.f32 0.0, %v914
        %v916 = vpop.f32.mrf.mxu0
        %917 = vmatprep.mubr.f32.mxu0 0.0
        %918 = vmatmul.mubr.f32.gmra.mxu0 %v828
        %v919 = vpop.f32.mrf.mxu0
        %v920 = vadd.f32 0.0, %v919
        %v921 = vpop.f32.mrf.mxu0
        %922 = vmatprep.mubr.f32.mxu0 0.0
        %923 = vmatmul.mubr.f32.gmra.mxu0 %v831
        %v924 = vpop.f32.mrf.mxu0
        %v925 = vadd.f32 0.0, %v924
        %v926 = vpop.f32.mrf.mxu0
        %927 = vmatprep.mubr.f32.mxu0 0.0
        %928 = vmatmul.mubr.f32.gmra.mxu0 %v834
        %v929 = vpop.f32.mrf.mxu0
        %v930 = vadd.f32 0.0, %v929
        %v931 = vpop.f32.mrf.mxu0
        %932 = vmatprep.mubr.f32.mxu0 0.0
        %933 = vmatmul.mubr.f32.gmra.mxu0 %v837
        %v934 = vpop.f32.mrf.mxu0
        %v935 = vadd.f32 0.0, %v934
        %v936 = vpop.f32.mrf.mxu0
        %937 = vmatprep.mubr.f32.mxu0 0.0
        %938 = vmatmul.mubr.f32.gmra.mxu0 %v840
        %v939 = vpop.f32.mrf.mxu0
        %v940 = vadd.f32 0.0, %v939
        %v941 = vpop.f32.mrf.mxu0
        %942 = vmatprep.mubr.f32.mxu0 0.0
        %943 = vmatmul.mubr.f32.gmra.mxu0 %v843
        %v944 = vpop.f32.mrf.mxu0
        %v945 = vadd.f32 0.0, %v944
        %v946 = vpop.f32.mrf.mxu0
        %947 = vmatprep.mubr.f32.mxu0 0.0
        %948 = vmatmul.mubr.f32.gmra.mxu0 %v846
        %v949 = vpop.f32.mrf.mxu0
        %v950 = vadd.f32 0.0, %v949
        %v951 = vpop.f32.mrf.mxu0
        %952 = vdwg.mxu0
        %v953 = vld [vmem:[%s1 + $0x110] sm:$0x1]
        %v954 = vld [vmem:[%s1 + $0x111] sm:$0x1]
        %v955 = vld [vmem:[%s1 + $0x112] sm:$0x1]
        %v956 = vld [vmem:[%s1 + $0x113] sm:$0x1]
        %v957 = vlaneseq
        %v958 = vshrl.u32 %v957, 7
        %v959 = vsub.s32 0, %v958
        %v960 = vrot.slane %v953, %v959
        %v961 = vadd.f32 %v915, %v960
        %v962 = vadd.f32 %v920, %v960
        %v963 = vadd.f32 %v925, %v960
        %v964 = vadd.f32 %v930, %v960
        %v965 = vadd.f32 %v935, %v960
        %v966 = vadd.f32 %v940, %v960
        %v967 = vadd.f32 %v945, %v960
        %v968 = vadd.f32 %v950, %v960
        %v969 = vlaneseq
        %v970 = vshrl.u32 %v969, 7
        %v971 = vsub.s32 0, %v970
        %v972 = vrot.slane %v954, %v971
        %974 = vrot.lane.b32.xlu0 %v972, 32
        %v975 = vpop.permute.xlu0 %974
        %v977 = vadd.f32 %v915, %v975
        %v978 = vadd.f32 %v920, %v975
        %v979 = vadd.f32 %v925, %v975
        %v980 = vadd.f32 %v930, %v975
        %v981 = vadd.f32 %v935, %v975
        %v982 = vadd.f32 %v940, %v975
        %v983 = vadd.f32 %v945, %v975
        %v984 = vadd.f32 %v950, %v975
        %v985 = vmax.f32 %v961, 0.0
        %v986 = vmax.f32 %v962, 0.0
        %v987 = vmax.f32 %v963, 0.0
        %v988 = vmax.f32 %v964, 0.0
        %v989 = vmax.f32 %v965, 0.0
        %v990 = vmax.f32 %v966, 0.0
        %v991 = vmax.f32 %v967, 0.0
        %v992 = vmax.f32 %v968, 0.0
        %v993 = vxor.u32 %v977, 2147483648
        %v994 = vxor.u32 %v978, 2147483648
        %v995 = vxor.u32 %v979, 2147483648
        %v996 = vxor.u32 %v980, 2147483648
        %v997 = vxor.u32 %v981, 2147483648
        %v998 = vxor.u32 %v982, 2147483648
        %v999 = vxor.u32 %v983, 2147483648
        %v1000 = vxor.u32 %v984, 2147483648
        %v1001 = vmul.f32 %v993, 1.442695
        %v1002 = vpow.pop %v1001
        %v1003 = vmul.f32 %v994, 1.442695
        %v1004 = vpow.pop %v1003
        %v1005 = vmul.f32 %v995, 1.442695
        %v1006 = vpow.pop %v1005
        %v1007 = vmul.f32 %v996, 1.442695
        %v1008 = vpow.pop %v1007
        %v1009 = vmul.f32 %v997, 1.442695
        %v1010 = vpow.pop %v1009
        %v1011 = vmul.f32 %v998, 1.442695
        %v1012 = vpow.pop %v1011
        %v1013 = vmul.f32 %v999, 1.442695
        %v1014 = vpow.pop %v1013
        %v1015 = vmul.f32 %v1000, 1.442695
        %v1016 = vpow.pop %v1015
        %v1017 = vadd.f32 %v1002, 1.0
        %v1018 = vadd.f32 %v1004, 1.0
        %v1019 = vadd.f32 %v1006, 1.0
        %v1020 = vadd.f32 %v1008, 1.0
        %v1021 = vadd.f32 %v1010, 1.0
        %v1022 = vadd.f32 %v1012, 1.0
        %v1023 = vadd.f32 %v1014, 1.0
        %v1024 = vadd.f32 %v1016, 1.0
        %v1025 = vrcp.pop %v1017
        %v1026 = vmul.f32 1.0, %v1025
        %v1027 = vrcp.pop %v1018
        %v1028 = vmul.f32 1.0, %v1027
        %v1029 = vrcp.pop %v1019
        %v1030 = vmul.f32 1.0, %v1029
        %v1031 = vrcp.pop %v1020
        %v1032 = vmul.f32 1.0, %v1031
        %v1033 = vrcp.pop %v1021
        %v1034 = vmul.f32 1.0, %v1033
        %v1035 = vrcp.pop %v1022
        %v1036 = vmul.f32 1.0, %v1035
        %v1037 = vrcp.pop %v1023
        %v1038 = vmul.f32 1.0, %v1037
        %v1039 = vrcp.pop %v1024
        %v1040 = vmul.f32 1.0, %v1039
        %1049 = vrot.lane.b32.xlu0 %v1026, 96
        %v1050 = vpop.permute.xlu0 %1049
        %1051 = vrot.lane.b32.xlu0 %v1028, 96
        %v1052 = vpop.permute.xlu0 %1051
        %1053 = vrot.lane.b32.xlu0 %v1030, 96
        %v1054 = vpop.permute.xlu0 %1053
        %1055 = vrot.lane.b32.xlu0 %v1032, 96
        %v1056 = vpop.permute.xlu0 %1055
        %1057 = vrot.lane.b32.xlu0 %v1034, 96
        %v1058 = vpop.permute.xlu0 %1057
        %1059 = vrot.lane.b32.xlu0 %v1036, 96
        %v1060 = vpop.permute.xlu0 %1059
        %1061 = vrot.lane.b32.xlu0 %v1038, 96
        %v1062 = vpop.permute.xlu0 %1061
        %1063 = vrot.lane.b32.xlu0 %v1040, 96
        %v1064 = vpop.permute.xlu0 %1063
        %v1073 = vmul.f32 %v985, %v1050
        %v1074 = vmul.f32 %v986, %v1052
        %v1075 = vmul.f32 %v987, %v1054
        %v1076 = vmul.f32 %v988, %v1056
        %v1077 = vmul.f32 %v989, %v1058
        %v1078 = vmul.f32 %v990, %v1060
        %v1079 = vmul.f32 %v991, %v1062
        %v1080 = vmul.f32 %v992, %v1064
        %v1081 = vlaneseq
        %v1082 = vshrl.u32 %v1081, 7
        %v1083 = vsub.s32 0, %v1082
        %v1084 = vrot.slane %v955, %v1083
        %v1085 = vmul.f32 %v1073, %v1084
        %v1086 = vmul.f32 %v1074, %v1084
        %v1087 = vmul.f32 %v1075, %v1084
        %v1088 = vmul.f32 %v1076, %v1084
        %v1089 = vmul.f32 %v1077, %v1084
        %v1090 = vmul.f32 %v1078, %v1084
        %v1091 = vmul.f32 %v1079, %v1084
        %v1092 = vmul.f32 %v1080, %v1084
        %v1093 = vlaneseq
        %v1094 = vshrl.u32 %v1093, 7
        %v1095 = vsub.s32 0, %v1094
        %v1096 = vrot.slane %v956, %v1095
        %v1097 = vadd.f32 %v1085, %v1096
        %v1098 = vadd.f32 %v1086, %v1096
        %v1099 = vadd.f32 %v1087, %v1096
        %v1100 = vadd.f32 %v1088, %v1096
        %v1101 = vadd.f32 %v1089, %v1096
        %v1102 = vadd.f32 %v1090, %v1096
        %v1103 = vadd.f32 %v1091, %v1096
        %v1104 = vadd.f32 %v1092, %v1096
        %v1105 = vadd.f32 %v1097, %v727
        %v1106 = vadd.f32 %v1098, %v728
        %v1107 = vadd.f32 %v1099, %v729
        %v1108 = vadd.f32 %v1100, %v730
        %v1109 = vadd.f32 %v1101, %v731
        %v1110 = vadd.f32 %v1102, %v732
        %v1111 = vadd.f32 %v1103, %v733
        %v1112 = vadd.f32 %v1104, %v734
        %v1113 = vadd.f32 %v1105, %v696
        %v1114 = vadd.f32 %v1106, %v698
        %v1115 = vadd.f32 %v1107, %v700
        %v1116 = vadd.f32 %v1108, %v702
        %v1117 = vadd.f32 %v1109, %v704
        %v1118 = vadd.f32 %v1110, %v706
        %v1119 = vadd.f32 %v1111, %v708
        %v1120 = vadd.f32 %v1112, %v710
        %1125 = vrot.lane.b32.xlu0 %v1115, 32
        %v1126 = vpop.permute.xlu0 %1125
        %1127 = vrot.lane.b32.xlu0 %v1116, 32
        %v1128 = vpop.permute.xlu0 %1127
        %1129 = vrot.lane.b32.xlu0 %v1117, 32
        %v1130 = vpop.permute.xlu0 %1129
        %1131 = vrot.lane.b32.xlu0 %v1118, 32
        %v1132 = vpop.permute.xlu0 %1131
        %1139 = vrot.lane.b32.xlu0 %v1117, 64
        %v1140 = vpop.permute.xlu0 %1139
        %1141 = vrot.lane.b32.xlu0 %v1118, 64
        %v1142 = vpop.permute.xlu0 %1141
        %1143 = vrot.lane.b32.xlu0 %v1119, 64
        %v1144 = vpop.permute.xlu0 %1143
        %1145 = vrot.lane.b32.xlu0 %v1120, 64
        %v1146 = vpop.permute.xlu0 %1145
        %v1151 = vsel %vm793, %v1113, %v1126
        %v1152 = vsel %vm793, %v1114, %v1128
        %v1153 = vsel %vm793, %v1115, %v1130
        %v1154 = vsel %vm793, %v1116, %v1132
        %v1155 = vsel %vm802, %v1151, %v1140
        %v1156 = vsel %vm802, %v1152, %v1142
        %v1157 = vsel %vm802, %v1153, %v1144
        %v1158 = vsel %vm802, %v1154, %v1146
        %v1159 = vld [vmem:[%s1 + $0x6c] sm:$0xff]
        %v1160 = vld [vmem:[%s1 + $0x74] sm:$0xff]
        %v1161 = vld [vmem:[%s1 + $0x7c] sm:$0xff]
        %v1162 = vld [vmem:[%s1 + $0x84] sm:$0xff]
        %v1163 = vld [vmem:[%s1 + $0x8c] sm:$0xff]
        %v1164 = vld [vmem:[%s1 + $0x94] sm:$0xff]
        %v1165 = vld [vmem:[%s1 + $0x9c] sm:$0xff]
        %v1166 = vld [vmem:[%s1 + $0xa4] sm:$0xff]
        %v1167 = vld [vmem:[%s1 + $0xac] sm:$0xff]
        %v1168 = vld [vmem:[%s1 + $0xb4] sm:$0xff]
        %v1169 = vld [vmem:[%s1 + $0xbc] sm:$0xff]
        %v1170 = vld [vmem:[%s1 + $0xc4] sm:$0xff]
        %v1172 = vsel %vm823, %v1155, 0
        %v1175 = vsel %vm823, %v1156, 0
        %v1178 = vsel %vm823, %v1157, 0
        %v1181 = vsel %vm823, %v1158, 0
        %1183 = vmatprep.subr.mxu0 0.0
        %1184 = vmatpush1.msra.mxu0 0.0
        %1185 = vmatprep.subr.mxu0 0.0
        %1186 = vmatpush1.msra.mxu0 0.0
        %1187 = vmatprep.subr.mxu0 0.0
        %1188 = vmatpush1.msra.mxu0 0.0
        %1189 = vmatprep.subr.mxu0 0.0
        %1190 = vmatpush1.msra.mxu0 0.0
        %1191 = vmatprep.subr.mxu0 0.0
        %1192 = vmatpush1.msra.mxu0 %v1170
        %1193 = vmatprep.subr.mxu0 0.0
        %1194 = vmatpush1.msra.mxu0 %v1169
        %1195 = vmatprep.subr.mxu0 0.0
        %1196 = vmatpush1.msra.mxu0 %v1168
        %1197 = vmatprep.subr.mxu0 0.0
        %1198 = vmatpush1.msra.mxu0 %v1167
        %1199 = vmatprep.subr.mxu0 0.0
        %1200 = vmatpush1.msra.mxu0 %v1166
        %1201 = vmatprep.subr.mxu0 0.0
        %1202 = vmatpush1.msra.mxu0 %v1165
        %1203 = vmatprep.subr.mxu0 0.0
        %1204 = vmatpush1.msra.mxu0 %v1164
        %1205 = vmatprep.subr.mxu0 0.0
        %1206 = vmatpush1.msra.mxu0 %v1163
        %1207 = vmatprep.subr.mxu0 0.0
        %1208 = vmatpush1.msra.mxu0 %v1162
        %1209 = vmatprep.subr.mxu0 0.0
        %1210 = vmatpush1.msra.mxu0 %v1161
        %1211 = vmatprep.subr.mxu0 0.0
        %1212 = vmatpush1.msra.mxu0 %v1160
        %1213 = vmatprep.subr.mxu0 0.0
        %1214 = vmatpush1.msra.mxu0 %v1159
        %1215 = vmatprep.subr.mxu0 0.0
        %1216 = vmatpush2.msra.mxu0 0.0
        %1217 = vmatprep.subr.mxu0 0.0
        %1218 = vmatpush2.msra.mxu0 0.0
        %1219 = vmatprep.subr.mxu0 0.0
        %1220 = vmatpush2.msra.mxu0 0.0
        %1221 = vmatprep.subr.mxu0 0.0
        %1222 = vmatpush2.msra.mxu0 0.0
        %1223 = vmatprep.subr.mxu0 0.0
        %1224 = vmatpush2.msra.mxu0 0.0
        %1225 = vmatprep.subr.mxu0 0.0
        %1226 = vmatpush2.msra.mxu0 0.0
        %1227 = vmatprep.subr.mxu0 0.0
        %1228 = vmatpush2.msra.mxu0 0.0
        %1229 = vmatprep.subr.mxu0 0.0
        %1230 = vmatpush2.msra.mxu0 0.0
        %1231 = vmatprep.subr.mxu0 0.0
        %1232 = vmatpush2.msra.mxu0 0.0
        %1233 = vmatprep.subr.mxu0 0.0
        %1234 = vmatpush2.msra.mxu0 0.0
        %1235 = vmatprep.subr.mxu0 0.0
        %1236 = vmatpush2.msra.mxu0 0.0
        %1237 = vmatprep.subr.mxu0 0.0
        %1238 = vmatpush2.msra.mxu0 0.0
        %1239 = vmatprep.subr.mxu0 0.0
        %1240 = vmatpush2.msra.mxu0 0.0
        %1241 = vmatprep.subr.mxu0 0.0
        %1242 = vmatpush2.msra.mxu0 0.0
        %1243 = vmatprep.subr.mxu0 0.0
        %1244 = vmatpush2.msra.mxu0 0.0
        %1245 = vmatprep.subr.mxu0 0.0
        %1246 = vmatpush2.msra.mxu0 0.0
        %1247 = vmatprep.mubr.f32.mxu0 0.0
        %1248 = vmatmul.mubr.f32.gmra.mxu0 %v1172
        %v1249 = vpop.f32.mrf.mxu0
        %v1250 = vadd.f32 0.0, %v1249
        %v1251 = vpop.f32.mrf.mxu0
        %1252 = vmatprep.mubr.f32.mxu0 0.0
        %1253 = vmatmul.mubr.f32.gmra.mxu0 %v1175
        %v1254 = vpop.f32.mrf.mxu0
        %v1255 = vadd.f32 0.0, %v1254
        %v1256 = vpop.f32.mrf.mxu0
        %1257 = vmatprep.mubr.f32.mxu0 0.0
        %1258 = vmatmul.mubr.f32.gmra.mxu0 %v1178
        %v1259 = vpop.f32.mrf.mxu0
        %v1260 = vadd.f32 0.0, %v1259
        %v1261 = vpop.f32.mrf.mxu0
        %1262 = vmatprep.mubr.f32.mxu0 0.0
        %1263 = vmatmul.mubr.f32.gmra.mxu0 %v1181
        %v1264 = vpop.f32.mrf.mxu0
        %v1265 = vadd.f32 0.0, %v1264
        %v1266 = vpop.f32.mrf.mxu0
        %1267 = vdwg.mxu0
        %v1268 = vld [vmem:[%s1 + $0x114] sm:$0x1]
        %v1269 = vld [vmem:[%s1 + $0x115] sm:$0x1]
        %v1270 = vld [vmem:[%s1 + $0x116] sm:$0x1]
        %v1271 = vld [vmem:[%s1 + $0x117] sm:$0x1]
        %v1272 = vlaneseq
        %v1273 = vshrl.u32 %v1272, 7
        %v1274 = vsub.s32 0, %v1273
        %v1275 = vrot.slane %v1268, %v1274
        %v1276 = vadd.f32 %v1250, %v1275
        %v1277 = vadd.f32 %v1255, %v1275
        %v1278 = vadd.f32 %v1260, %v1275
        %v1279 = vadd.f32 %v1265, %v1275
        %v1280 = vlaneseq
        %v1281 = vshrl.u32 %v1280, 7
        %v1282 = vsub.s32 0, %v1281
        %v1283 = vrot.slane %v1269, %v1282
        %1285 = vrot.lane.b32.xlu0 %v1283, 32
        %v1286 = vpop.permute.xlu0 %1285
        %v1288 = vadd.f32 %v1250, %v1286
        %v1289 = vadd.f32 %v1255, %v1286
        %v1290 = vadd.f32 %v1260, %v1286
        %v1291 = vadd.f32 %v1265, %v1286
        %v1292 = vmax.f32 %v1276, 0.0
        %v1293 = vmax.f32 %v1277, 0.0
        %v1294 = vmax.f32 %v1278, 0.0
        %v1295 = vmax.f32 %v1279, 0.0
        %v1296 = vxor.u32 %v1288, 2147483648
        %v1297 = vxor.u32 %v1289, 2147483648
        %v1298 = vxor.u32 %v1290, 2147483648
        %v1299 = vxor.u32 %v1291, 2147483648
        %v1300 = vmul.f32 %v1296, 1.442695
        %v1301 = vpow.pop %v1300
        %v1302 = vmul.f32 %v1297, 1.442695
        %v1303 = vpow.pop %v1302
        %v1304 = vmul.f32 %v1298, 1.442695
        %v1305 = vpow.pop %v1304
        %v1306 = vmul.f32 %v1299, 1.442695
        %v1307 = vpow.pop %v1306
        %v1308 = vadd.f32 %v1301, 1.0
        %v1309 = vadd.f32 %v1303, 1.0
        %v1310 = vadd.f32 %v1305, 1.0
        %v1311 = vadd.f32 %v1307, 1.0
        %v1312 = vrcp.pop %v1308
        %v1313 = vmul.f32 1.0, %v1312
        %v1314 = vrcp.pop %v1309
        %v1315 = vmul.f32 1.0, %v1314
        %v1316 = vrcp.pop %v1310
        %v1317 = vmul.f32 1.0, %v1316
        %v1318 = vrcp.pop %v1311
        %v1319 = vmul.f32 1.0, %v1318
        %1324 = vrot.lane.b32.xlu0 %v1313, 96
        %v1325 = vpop.permute.xlu0 %1324
        %1326 = vrot.lane.b32.xlu0 %v1315, 96
        %v1327 = vpop.permute.xlu0 %1326
        %1328 = vrot.lane.b32.xlu0 %v1317, 96
        %v1329 = vpop.permute.xlu0 %1328
        %1330 = vrot.lane.b32.xlu0 %v1319, 96
        %v1331 = vpop.permute.xlu0 %1330
        %v1336 = vmul.f32 %v1292, %v1325
        %v1337 = vmul.f32 %v1293, %v1327
        %v1338 = vmul.f32 %v1294, %v1329
        %v1339 = vmul.f32 %v1295, %v1331
        %v1340 = vlaneseq
        %v1341 = vshrl.u32 %v1340, 7
        %v1342 = vsub.s32 0, %v1341
        %v1343 = vrot.slane %v1270, %v1342
        %v1344 = vmul.f32 %v1336, %v1343
        %v1345 = vmul.f32 %v1337, %v1343
        %v1346 = vmul.f32 %v1338, %v1343
        %v1347 = vmul.f32 %v1339, %v1343
        %v1348 = vlaneseq
        %v1349 = vshrl.u32 %v1348, 7
        %v1350 = vsub.s32 0, %v1349
        %v1351 = vrot.slane %v1271, %v1350
        %v1352 = vadd.f32 %v1344, %v1351
        %v1353 = vadd.f32 %v1345, %v1351
        %v1354 = vadd.f32 %v1346, %v1351
        %v1355 = vadd.f32 %v1347, %v1351
        %v1356 = vadd.f32 %v1352, %v1117
        %v1357 = vadd.f32 %v1353, %v1118
        %v1358 = vadd.f32 %v1354, %v1119
        %v1359 = vadd.f32 %v1355, %v1120
        %v1360 = vadd.f32 %v1356, %v704
        %v1361 = vadd.f32 %v1357, %v706
        %v1362 = vadd.f32 %v1358, %v708
        %v1363 = vadd.f32 %v1359, %v710
        %1366 = vrot.lane.b32.xlu0 %v1362, 32
        %v1367 = vpop.permute.xlu0 %1366
        %1368 = vrot.lane.b32.xlu0 %v1363, 32
        %v1369 = vpop.permute.xlu0 %1368
        %v1372 = vsel %vm793, %v1360, %v1367
        %v1373 = vsel %vm793, %v1361, %v1369
        %v1374 = vld [vmem:[%s1 + $0xcc] sm:$0xff]
        %v1375 = vld [vmem:[%s1 + $0xd4] sm:$0xff]
        %v1376 = vld [vmem:[%s1 + $0xdc] sm:$0xff]
        %v1377 = vld [vmem:[%s1 + $0xe4] sm:$0xff]
        %v1378 = vld [vmem:[%s1 + $0xec] sm:$0xff]
        %v1379 = vld [vmem:[%s1 + $0xf4] sm:$0xff]
        %v1380 = vld [vmem:[%s1 + $0xfc] sm:$0xff]
        %v1381 = vld [vmem:[%s1 + $0x104] sm:$0xff]
        %v1383 = vsel %vm802, %v1372, 0
        %v1386 = vsel %vm802, %v1373, 0
        %1388 = vmatprep.subr.mxu0 0.0
        %1389 = vmatpush1.msra.mxu0 0.0
        %1390 = vmatprep.subr.mxu0 0.0
        %1391 = vmatpush1.msra.mxu0 0.0
        %1392 = vmatprep.subr.mxu0 0.0
        %1393 = vmatpush1.msra.mxu0 0.0
        %1394 = vmatprep.subr.mxu0 0.0
        %1395 = vmatpush1.msra.mxu0 0.0
        %1396 = vmatprep.subr.mxu0 0.0
        %1397 = vmatpush1.msra.mxu0 0.0
        %1398 = vmatprep.subr.mxu0 0.0
        %1399 = vmatpush1.msra.mxu0 0.0
        %1400 = vmatprep.subr.mxu0 0.0
        %1401 = vmatpush1.msra.mxu0 0.0
        %1402 = vmatprep.subr.mxu0 0.0
        %1403 = vmatpush1.msra.mxu0 0.0
        %1404 = vmatprep.subr.mxu0 0.0
        %1405 = vmatpush1.msra.mxu0 %v1381
        %1406 = vmatprep.subr.mxu0 0.0
        %1407 = vmatpush1.msra.mxu0 %v1380
        %1408 = vmatprep.subr.mxu0 0.0
        %1409 = vmatpush1.msra.mxu0 %v1379
        %1410 = vmatprep.subr.mxu0 0.0
        %1411 = vmatpush1.msra.mxu0 %v1378
        %1412 = vmatprep.subr.mxu0 0.0
        %1413 = vmatpush1.msra.mxu0 %v1377
        %1414 = vmatprep.subr.mxu0 0.0
        %1415 = vmatpush1.msra.mxu0 %v1376
        %1416 = vmatprep.subr.mxu0 0.0
        %1417 = vmatpush1.msra.mxu0 %v1375
        %1418 = vmatprep.subr.mxu0 0.0
        %1419 = vmatpush1.msra.mxu0 %v1374
        %1420 = vmatprep.subr.mxu0 0.0
        %1421 = vmatpush2.msra.mxu0 0.0
        %1422 = vmatprep.subr.mxu0 0.0
        %1423 = vmatpush2.msra.mxu0 0.0
        %1424 = vmatprep.subr.mxu0 0.0
        %1425 = vmatpush2.msra.mxu0 0.0
        %1426 = vmatprep.subr.mxu0 0.0
        %1427 = vmatpush2.msra.mxu0 0.0
        %1428 = vmatprep.subr.mxu0 0.0
        %1429 = vmatpush2.msra.mxu0 0.0
        %1430 = vmatprep.subr.mxu0 0.0
        %1431 = vmatpush2.msra.mxu0 0.0
        %1432 = vmatprep.subr.mxu0 0.0
        %1433 = vmatpush2.msra.mxu0 0.0
        %1434 = vmatprep.subr.mxu0 0.0
        %1435 = vmatpush2.msra.mxu0 0.0
        %1436 = vmatprep.subr.mxu0 0.0
        %1437 = vmatpush2.msra.mxu0 0.0
        %1438 = vmatprep.subr.mxu0 0.0
        %1439 = vmatpush2.msra.mxu0 0.0
        %1440 = vmatprep.subr.mxu0 0.0
        %1441 = vmatpush2.msra.mxu0 0.0
        %1442 = vmatprep.subr.mxu0 0.0
        %1443 = vmatpush2.msra.mxu0 0.0
        %1444 = vmatprep.subr.mxu0 0.0
        %1445 = vmatpush2.msra.mxu0 0.0
        %1446 = vmatprep.subr.mxu0 0.0
        %1447 = vmatpush2.msra.mxu0 0.0
        %1448 = vmatprep.subr.mxu0 0.0
        %1449 = vmatpush2.msra.mxu0 0.0
        %1450 = vmatprep.subr.mxu0 0.0
        %1451 = vmatpush2.msra.mxu0 0.0
        %1452 = vmatprep.mubr.f32.mxu0 0.0
        %1453 = vmatmul.mubr.f32.gmra.mxu0 %v1383
        %v1454 = vpop.f32.mrf.mxu0
        %v1455 = vadd.f32 0.0, %v1454
        %v1456 = vpop.f32.mrf.mxu0
        %1457 = vmatprep.mubr.f32.mxu0 0.0
        %1458 = vmatmul.mubr.f32.gmra.mxu0 %v1386
        %v1459 = vpop.f32.mrf.mxu0
        %v1460 = vadd.f32 0.0, %v1459
        %v1461 = vpop.f32.mrf.mxu0
        %1462 = vdwg.mxu0
        %v1463 = vld [vmem:[%s1 + $0x118] sm:$0x1]
        %v1464 = vld [vmem:[%s1 + $0x119] sm:$0x1]
        %v1465 = vld [vmem:[%s1 + $0x11a] sm:$0x1]
        %v1466 = vld [vmem:[%s1 + $0x11b] sm:$0x1]
        %v1467 = vlaneseq
        %v1468 = vshrl.u32 %v1467, 7
        %v1469 = vsub.s32 0, %v1468
        %v1470 = vrot.slane %v1463, %v1469
        %v1471 = vadd.f32 %v1455, %v1470
        %v1472 = vadd.f32 %v1460, %v1470
        %v1473 = vlaneseq
        %v1474 = vshrl.u32 %v1473, 7
        %v1475 = vsub.s32 0, %v1474
        %v1476 = vrot.slane %v1464, %v1475
        %1478 = vrot.lane.b32.xlu0 %v1476, 32
        %v1479 = vpop.permute.xlu0 %1478
        %v1481 = vadd.f32 %v1455, %v1479
        %v1482 = vadd.f32 %v1460, %v1479
        %v1483 = vmax.f32 %v1471, 0.0
        %v1484 = vmax.f32 %v1472, 0.0
        %v1485 = vxor.u32 %v1481, 2147483648
        %v1486 = vxor.u32 %v1482, 2147483648
        %v1487 = vmul.f32 %v1485, 1.442695
        %v1488 = vpow.pop %v1487
        %v1489 = vmul.f32 %v1486, 1.442695
        %v1490 = vpow.pop %v1489
        %v1491 = vadd.f32 %v1488, 1.0
        %v1492 = vadd.f32 %v1490, 1.0
        %v1493 = vrcp.pop %v1491
        %v1494 = vmul.f32 1.0, %v1493
        %v1495 = vrcp.pop %v1492
        %v1496 = vmul.f32 1.0, %v1495
        %1499 = vrot.lane.b32.xlu0 %v1494, 96
        %v1500 = vpop.permute.xlu0 %1499
        %1501 = vrot.lane.b32.xlu0 %v1496, 96
        %v1502 = vpop.permute.xlu0 %1501
        %v1505 = vmul.f32 %v1483, %v1500
        %v1506 = vmul.f32 %v1484, %v1502
        %v1507 = vlaneseq
        %v1508 = vshrl.u32 %v1507, 7
        %v1509 = vsub.s32 0, %v1508
        %v1510 = vrot.slane %v1465, %v1509
        %v1511 = vmul.f32 %v1505, %v1510
        %v1512 = vmul.f32 %v1506, %v1510
        %v1513 = vlaneseq
        %v1514 = vshrl.u32 %v1513, 7
        %v1515 = vsub.s32 0, %v1514
        %v1516 = vrot.slane %v1466, %v1515
        %v1517 = vadd.f32 %v1511, %v1516
        %v1518 = vadd.f32 %v1512, %v1516
        %v1519 = vadd.f32 %v1517, %v1362
        %v1520 = vadd.f32 %v1518, %v1363
        %v1521 = vadd.f32 %v1519, %v708
        %v1522 = vadd.f32 %v1520, %v710
        %v1523 = vcombine.high %v1521, 0.0
        %v1525 = vunpack.c.l.s4 1983009808
        %v1526 = vunpack.c.0.s8 %v1525
        %v1527 = vlaneseq
        %v1528 = vshrl.u32 %v1527, 7
        %v1529 = vsub.s32 %v1526, %v1528
        %v1530 = vrot.slane %v1521, %v1529
        %v1532 = vunpack.c.l.s4 1983009808
        %v1533 = vunpack.c.0.s8 %v1532
        %v1534 = vlaneseq
        %v1535 = vshrl.u32 %v1534, 7
        %v1536 = vsub.s32 %v1533, %v1535
        %v1537 = vrot.slane %v1523, %v1536
        %v1538 = vcombine.high %v1530, 0.0
        %v1540 = vunpack.c.l.s4 1934713408
        %v1541 = vunpack.c.0.s8 %v1540
        %v1542 = vlaneseq
        %v1543 = vshrl.u32 %v1542, 7
        %v1544 = vsub.s32 %v1541, %v1543
        %v1545 = vrot.slane %v1530, %v1544
        %v1547 = vunpack.c.l.s4 1934713408
        %v1548 = vunpack.c.0.s8 %v1547
        %v1549 = vlaneseq
        %v1550 = vshrl.u32 %v1549, 7
        %v1551 = vsub.s32 %v1548, %v1550
        %v1552 = vrot.slane %v1538, %v1551
        %v1553 = vcombine.high %v1537, 0.0
        %v1555 = vunpack.c.l.s4 1934713408
        %v1556 = vunpack.c.0.s8 %v1555
        %v1557 = vlaneseq
        %v1558 = vshrl.u32 %v1557, 7
        %v1559 = vsub.s32 %v1556, %v1558
        %v1560 = vrot.slane %v1537, %v1559
        %v1562 = vunpack.c.l.s4 1934713408
        %v1563 = vunpack.c.0.s8 %v1562
        %v1564 = vlaneseq
        %v1565 = vshrl.u32 %v1564, 7
        %v1566 = vsub.s32 %v1563, %v1565
        %v1567 = vrot.slane %v1553, %v1566
        %v1568 = vcombine.high %v1545, 0.0
        %v1569 = vcombine.high %v1552, 0.0
        %v1570 = vcombine.high %v1560, 0.0
        %v1571 = vcombine.high %v1567, 0.0
        %v1572 = vcombine.high %v1522, 0.0
        %v1574 = vunpack.c.l.s4 1983009808
        %v1575 = vunpack.c.0.s8 %v1574
        %v1576 = vlaneseq
        %v1577 = vshrl.u32 %v1576, 7
        %v1578 = vsub.s32 %v1575, %v1577
        %v1579 = vrot.slane %v1522, %v1578
        %v1581 = vunpack.c.l.s4 1983009808
        %v1582 = vunpack.c.0.s8 %v1581
        %v1583 = vlaneseq
        %v1584 = vshrl.u32 %v1583, 7
        %v1585 = vsub.s32 %v1582, %v1584
        %v1586 = vrot.slane %v1572, %v1585
        %v1587 = vcombine.high %v1579, 0.0
        %v1589 = vunpack.c.l.s4 1934713408
        %v1590 = vunpack.c.0.s8 %v1589
        %v1591 = vlaneseq
        %v1592 = vshrl.u32 %v1591, 7
        %v1593 = vsub.s32 %v1590, %v1592
        %v1594 = vrot.slane %v1579, %v1593
        %v1596 = vunpack.c.l.s4 1934713408
        %v1597 = vunpack.c.0.s8 %v1596
        %v1598 = vlaneseq
        %v1599 = vshrl.u32 %v1598, 7
        %v1600 = vsub.s32 %v1597, %v1599
        %v1601 = vrot.slane %v1587, %v1600
        %v1602 = vcombine.high %v1586, 0.0
        %v1604 = vunpack.c.l.s4 1934713408
        %v1605 = vunpack.c.0.s8 %v1604
        %v1606 = vlaneseq
        %v1607 = vshrl.u32 %v1606, 7
        %v1608 = vsub.s32 %v1605, %v1607
        %v1609 = vrot.slane %v1586, %v1608
        %v1611 = vunpack.c.l.s4 1934713408
        %v1612 = vunpack.c.0.s8 %v1611
        %v1613 = vlaneseq
        %v1614 = vshrl.u32 %v1613, 7
        %v1615 = vsub.s32 %v1612, %v1614
        %v1616 = vrot.slane %v1602, %v1615
        %v1617 = vcombine.high %v1594, 0.0
        %v1618 = vcombine.high %v1601, 0.0
        %v1619 = vcombine.high %v1609, 0.0
        %v1620 = vcombine.high %v1616, 0.0
        %1622 = vrot.lane.b32.xlu0 %v1568, 32
        %v1623 = vpop.permute.xlu0 %1622
        %1626 = vrot.lane.b32.xlu0 %v1552, 64
        %v1627 = vpop.permute.xlu0 %1626
        %1630 = vrot.lane.b32.xlu0 %v1569, 96
        %v1631 = vpop.permute.xlu0 %1630
        %1634 = vrot.lane.b32.xlu0 %v1570, 32
        %v1635 = vpop.permute.xlu0 %1634
        %1638 = vrot.lane.b32.xlu0 %v1567, 64
        %v1639 = vpop.permute.xlu0 %1638
        %1642 = vrot.lane.b32.xlu0 %v1571, 96
        %v1643 = vpop.permute.xlu0 %1642
        %1646 = vrot.lane.b32.xlu0 %v1617, 32
        %v1647 = vpop.permute.xlu0 %1646
        %1650 = vrot.lane.b32.xlu0 %v1601, 64
        %v1651 = vpop.permute.xlu0 %1650
        %1654 = vrot.lane.b32.xlu0 %v1618, 96
        %v1655 = vpop.permute.xlu0 %1654
        %1658 = vrot.lane.b32.xlu0 %v1619, 32
        %v1659 = vpop.permute.xlu0 %1658
        %1662 = vrot.lane.b32.xlu0 %v1616, 64
        %v1663 = vpop.permute.xlu0 %1662
        %1666 = vrot.lane.b32.xlu0 %v1620, 96
        %v1667 = vpop.permute.xlu0 %1666
        %v1669 = vsel %vm793, %v1545, %v1623
        %v1670 = vsel %vm802, %v1669, %v1627
        %v1671 = vsel %vm823, %v1670, %v1631
        %v1672 = vsel %vm793, %v1560, %v1635
        %v1673 = vsel %vm802, %v1672, %v1639
        %v1674 = vsel %vm823, %v1673, %v1643
        %v1675 = vsel %vm793, %v1594, %v1647
        %v1676 = vsel %vm802, %v1675, %v1651
        %v1677 = vsel %vm823, %v1676, %v1655
        %v1678 = vsel %vm793, %v1609, %v1659
        %v1679 = vsel %vm802, %v1678, %v1663
        %v1680 = vsel %vm823, %v1679, %v1667
        %v1685 = vcombine.low %v1671, %v1674
        %v1686 = vcombine.low %v1677, %v1680
        %v1688 = vunpack.c.l.s4 1966171168
        %v1689 = vunpack.c.0.s8 %v1688
        %v1690 = vlaneseq
        %v1691 = vshrl.u32 %v1690, 7
        %v1692 = vsub.s32 %v1689, %v1691
        %v1693 = vrot.slane %v1685, %v1692
        %v1695 = vunpack.c.l.s4 1966171168
        %v1696 = vunpack.c.0.s8 %v1695
        %v1697 = vlaneseq
        %v1698 = vshrl.u32 %v1697, 7
        %v1699 = vsub.s32 %v1696, %v1698
        %v1700 = vrot.slane %v1686, %v1699
        %v1701 = vcombine.low %v1693, %v1700
        %v1703 = vunpack.c.l.s4 1966171168
        %v1704 = vunpack.c.0.s8 %v1703
        %v1705 = vlaneseq
        %v1706 = vshrl.u32 %v1705, 7
        %v1707 = vsub.s32 %v1704, %v1706
        %v1708 = vrot.slane %v1701, %v1707
        %v1710 = vlaneseq
        %vm1711 = vcmp.ge.s32.totalorder %v1710, 0
        %vm1712 = vcmp.lt.s32.totalorder %v1710, 512
        %vm1713 = vmand %vm1711, %vm1712
        %1714 = vst.msk [vmem:[%s136] sm:$0xf] %vm1713, %v1708
        %s1715 = sand.u32 %s71, 1
        %s1716 = scalar_lea.sflag [#allocation3], %s1715
        %s1717 = sand.u32 %s71, 1
        %s1718 = smul.addr %s1717, 4
        %s1719 = scalar_lea.vmem [#allocation2], %s1718
        // Predicated region
        $region29: #{tpu_custom_call.1} parent=27 // pred_check
          %p1720 = pneg %p81
        $region30: #{tpu_custom_call.1} parent=27 // pred_check_branch
          %1722 = sbr.rel (%p1720) target = $region32
        $region31: #{tpu_custom_call.1} parent=27 // pred_region
          %s1724 = ssub.s32 64, 64
          %1725 = vsyncadd %s1716, %s1724
          %s1726 = smul.addr %s16, 4
          %s1727 = smul.addr %s1726, 16
          %s1728 = scalar_lea.hbm %s2, %s1727
          %s1730 = sshll.u32 %s1719, 4
          %s1731 = int_to_ptr.vmem [resolvable:$true] %s1730
          %1733 = dma.vmem_to_hbm [thread:$0]  %s1731, 64, %s1728, %s1716
        $region32: #{tpu_custom_call.1} parent=27 // pred_fallthru
          _
      $region28: #{tpu_custom_call.1} parent=5 // pred_fallthru
        _
      %p1734 = scmp.le.s32.totalorder 2, %s11
      // Predicated region
      $region33: #{tpu_custom_call.1} parent=5 // pred_check
        %p1735 = pneg %p1734
      $region34: #{tpu_custom_call.1} parent=5 // pred_check_branch
        %1737 = sbr.rel (%p1735) target = $region36
      $region35: #{tpu_custom_call.1} parent=5 // pred_region
        %s1738 = ssub.s32 %s11, 2
        // Predicated region
        $region37: #{tpu_custom_call.1} parent=35 // pred_check
          %p1739 = pneg %p87
        $region38: #{tpu_custom_call.1} parent=35 // pred_check_branch
          %1741 = sbr.rel (%p1739) target = $region40
        $region39: #{tpu_custom_call.1} parent=35 // pred_region
          %s1742 = sand.u32 %s72, 1
          %s1743 = scalar_lea.sflag [#allocation3], %s1742
          %s1744 = sand.u32 %s72, 1
          %s1745 = smul.addr %s1744, 4
          %s1746 = scalar_lea.vmem [#allocation2], %s1745
          %1747 = dma.done %s1743, 64
        $region40: #{tpu_custom_call.1} parent=35 // pred_fallthru
          _
      $region36: #{tpu_custom_call.1} parent=5 // pred_fallthru
        _
    $region6: #{tpu_custom_call.1} parent=1 // loop_footer
      %s15 = sadd.s32 1, %s11
    $region7: #{tpu_custom_call.1} parent=1 // loop_footer_branch
      %10 = sbr.rel target = $region3
    $region8: #{tpu_custom_call.1} parent=1 // loop_exit
      _
    %1748 = vsyncpa [#allocation3], 1
    %s1749 = scalar_lea.sflag [#allocation3], 1
    %1750 = vsyncpa %s1749, 1

</llo_original>
